<compile_context>
chip_gen: v7x
topology: tpu7x:2x2x1
jax: 0.10.0
libtpu: 0.0.40
codegen_flags: <defaults>
</compile_context>

<pallas_src>
import functools

import jax
import jax.numpy as jnp
from jax import lax
from jax.experimental import pallas as pl
from jax.experimental.pallas import tpu as pltpu


MATMUL_DTYPE = jnp.bfloat16   # MXU operand dtype; accumulation stays f32.
GELU_TANH_APPROX = False      # False = exact erf (torch.nn.GELU default).
                              # True  = tanh approx -> EUP slot (perf review).
ROWS_TARGET = 512             # target bblk*S matmul rows (v6e/v7x); v5e: 128 is enough.
M_CHUNK_TARGET = 512          # mlp_dim contraction chunk (bounds VMEM intermediates).


def _gelu(x):
    if GELU_TANH_APPROX:
        inner = 0.7978845608028654 * (x + 0.044715 * x * x * x)
        return 0.5 * x * (1.0 + jnp.tanh(inner))
    # exact: 0.5*x*(1+erf(x/sqrt(2))) — matches torch.nn.GELU(approximate='none')
    return 0.5 * x * (1.0 + lax.erf(x * 0.7071067811865476))


# ----------------------------------------------------------------------------
# Kernel 1: patch embedding (hoisted out of the depth loop)
# ----------------------------------------------------------------------------
def _patch_embed_kernel(x_ref, ew_ref, eb_ref, o_ref):
    emb = jnp.dot(x_ref[0], ew_ref[...], preferred_element_type=jnp.float32)
    o_ref[0] = (emb + eb_ref[...]).astype(o_ref.dtype)


# ----------------------------------------------------------------------------
# Kernel 2: fused `depth` Mixure_Layers
# ----------------------------------------------------------------------------
def _mixer_layers_kernel(
    emb_ref, lnw_ref, lnb_ref,
    cw1t_ref, cb1_ref, cw2t_ref, cb2_ref,
    tw1_ref, tb1_ref, tw2_ref, tb2_ref,
    o_ref, y_sc,
    *, bblk, seq, mchunk, n_mchunk,
):
    """Grid = (batch_blocks, depth); depth is the inner ("arbitrary") axis.

    The output block (index map ignores d) is the resident activation carrier
    across the depth loop.  Per layer (PyTorch semantics):
        skip = x
        x = LayerNorm(x)                       # shared (lnw, lnb)
        x = channel_mix over tokens (S->M->S)  # transpose-free here
        x = x + skip
        x = LayerNorm(x)                       # same params
        x = token_mix over channels (C->M->C)  # no residual afterwards
    """
    d = pl.program_id(1)
    f32 = jnp.float32
    rows = bblk * seq
    C = o_ref.shape[-1]

    # Seed the resident activation from the precomputed patch embedding.
    @pl.when(d == 0)
    def _():
        o_ref[0] = emb_ref[0]

    lnw = lnw_ref[0]                                   # (1, C) f32
    lnb = lnb_ref[0]                                   # (1, C) f32

    def layernorm(v):
        # one-pass: mean and E[x^2] from the same sweep (halves XLU passes)
        mu = jnp.mean(v, axis=-1, keepdims=True)
        ex2 = jnp.mean(v * v, axis=-1, keepdims=True)
        var = jnp.maximum(ex2 - mu * mu, 0.0)
        return (v - mu) * lax.rsqrt(var + jnp.float32(1e-5)) * lnw + lnb

    # Channel-mix input (normalized skip path); skip itself stays in o_ref.
    y_sc[...] = layernorm(o_ref[0]).astype(MATMUL_DTYPE)     # (rows, C) bf16

    # ---- channel mix: mixes tokens (contraction over S), transpose-free ----
    #   ht[m, c] = sum_s cw1[s, m] * y[s, c]  (== h^T of the PyTorch graph)
    #   ob[s, c] = sum_m cw2[m, s] * g[m, c]  (lands directly in (S, C) layout)
    def channel_mix_one(b):
        start = b * seq if isinstance(b, int) else pl.multiple_of(b * seq, seq)
        yb = y_sc[pl.ds(start, seq), :]                                 # (S, C) bf16

        def m_body(i, ob):
            ms = i * mchunk if isinstance(i, int) else pl.multiple_of(i * mchunk, mchunk)
            w1c = cw1t_ref[0, pl.ds(ms, mchunk), :]                     # (Mc, S) bf16
            b1c = cb1_ref[0, pl.ds(ms, mchunk), :]                      # (Mc, 1) f32
            ht = jnp.dot(w1c, yb, preferred_element_type=f32) + b1c     # (Mc, C)
            g = _gelu(ht).astype(MATMUL_DTYPE)
            w2c = cw2t_ref[0, :, pl.ds(ms, mchunk)]                     # (S, Mc) bf16
            return ob + jnp.dot(w2c, g, preferred_element_type=f32)     # (S, C)

        ob0 = jnp.zeros((seq, C), f32)
        if n_mchunk == 1:
            ob = m_body(0, ob0)
        else:
            ob = lax.fori_loop(0, n_mchunk, m_body, ob0)

        # Residual add in place: these o_ref rows currently hold the skip.
        o_ref[0, pl.ds(start, seq), :] += ob + cb2_ref[0]               # bias over S

    if bblk == 1:
        channel_mix_one(0)
    else:
        def b_body(b, carry):
            channel_mix_one(b)
            return carry
        lax.fori_loop(0, bblk, b_body, 0, unroll=True)

    # ---- token mix: mixes channels (C -> M -> C), batch-folded rows ----
    z = layernorm(o_ref[0]).astype(MATMUL_DTYPE)                        # (rows, C) bf16

    def t_body(i, acc):
        ms = i * mchunk if isinstance(i, int) else pl.multiple_of(i * mchunk, mchunk)
        w1c = tw1_ref[0, :, pl.ds(ms, mchunk)]                          # (C, Mc) bf16
        b1c = tb1_ref[0, :, pl.ds(ms, mchunk)]                          # (1, Mc) f32
        t = jnp.dot(z, w1c, preferred_element_type=f32) + b1c           # (rows, Mc)
        g = _gelu(t).astype(MATMUL_DTYPE)
        w2c = tw2_ref[0, pl.ds(ms, mchunk), :]                          # (Mc, C) bf16
        return acc + jnp.dot(g, w2c, preferred_element_type=f32)        # (rows, C)

    acc0 = jnp.zeros((rows, C), f32)
    if n_mchunk == 1:
        acc = t_body(0, acc0)
    else:
        acc = lax.fori_loop(0, n_mchunk, t_body, acc0)

    # No residual after token_mix (matches the PyTorch module).
    o_ref[0] = (acc + tb2_ref[0]).astype(o_ref.dtype)


# ----------------------------------------------------------------------------
# Plain-JAX glue: patch extraction, params, heuristics, forward
# ----------------------------------------------------------------------------
def to_patches(img, patch_size):
    """'b c (h p1) (w p2) -> b (h w) (p1 p2 c)' — NCHW input (layout op only)."""
    B, C, H, W = img.shape
    h, w = H // patch_size, W // patch_size
    x = img.reshape(B, C, h, patch_size, w, patch_size)
    x = x.transpose(0, 2, 4, 3, 5, 1)            # b h w p1 p2 c
    return x.reshape(B, h * w, patch_size * patch_size * C)


def init_params(key, *, image_size, patch_size, channels, dim, depth, mlp_dim):
    num_patches = (image_size // patch_size) ** 2
    patch_dim = channels * patch_size ** 2

    def linear(key, fan_in, fan_out):
        kw, kb = jax.random.split(key)
        scale = 1.0 / jnp.sqrt(fan_in)
        w = jax.random.uniform(kw, (fan_in, fan_out), jnp.float32, -scale, scale)
        b = jax.random.uniform(kb, (fan_out,), jnp.float32, -scale, scale)
        return w, b

    keys = jax.random.split(key, 1 + depth)
    embed_w, embed_b = linear(keys[0], patch_dim, dim)

    layers = []
    for d in range(depth):
        k = jax.random.split(keys[1 + d], 4)
        lnw = jnp.ones((dim,), jnp.float32)
        lnb = jnp.zeros((dim,), jnp.float32)
        cw1, cb1 = linear(k[0], num_patches, mlp_dim)   # channel_mix fc1 (S->M)
        cw2, cb2 = linear(k[1], mlp_dim, num_patches)   # channel_mix fc2 (M->S)
        tw1, tb1 = linear(k[2], dim, mlp_dim)           # token_mix fc1 (C->M)
        tw2, tb2 = linear(k[3], mlp_dim, dim)           # token_mix fc2 (M->C)
        layers.append((lnw, lnb, cw1, cb1, cw2, cb2, tw1, tb1, tw2, tb2))

    return {"embed_w": embed_w, "embed_b": embed_b, "layers": layers}


def prepare_params(params):
    """Stack per-layer params on a leading depth axis (streamed by the depth
    grid axis), pre-transpose channel-mix weights (transpose-free kernel) and
    cast matmul weights to bf16.  Biases / LayerNorm params stay f32; cb1/cb2
    stay column-oriented ((M,1)/(S,1)) because the transpose-free channel mix
    needs a sublane-indexed bias (lane-dense packing would require an
    in-kernel vector relayout)."""
    layers = params["layers"]
    dt = MATMUL_DTYPE

    def stack(fn):
        return jnp.stack([fn(p) for p in layers], axis=0)

    return {
        "ew": params["embed_w"].astype(dt),                 # (P, C) bf16
        "eb": params["embed_b"].reshape(1, -1),             # (1, C) f32
        "lnw": stack(lambda p: p[0].reshape(1, -1)),        # (D, 1, C)
        "lnb": stack(lambda p: p[1].reshape(1, -1)),        # (D, 1, C)
        "cw1t": stack(lambda p: p[2].T.astype(dt)),         # (D, M, S)
        "cb1": stack(lambda p: p[3].reshape(-1, 1)),        # (D, M, 1)
        "cw2t": stack(lambda p: p[4].T.astype(dt)),         # (D, S, M)
        "cb2": stack(lambda p: p[5].reshape(-1, 1)),        # (D, S, 1)
        "tw1": stack(lambda p: p[6].astype(dt)),            # (D, C, M)
        "tb1": stack(lambda p: p[7].reshape(1, -1)),        # (D, 1, M)
        "tw2": stack(lambda p: p[8].astype(dt)),            # (D, M, C)
        "tb2": stack(lambda p: p[9].reshape(1, -1)),        # (D, 1, C)
    }


def _vmem_limit_bytes():
    """Per-generation scoped-VMEM budget (None -> keep the compiler default)."""
    try:
        kind = jax.devices()[0].device_kind.lower()
    except Exception:
        return None
    if "v7" in kind:
        return 56 * 1024 * 1024      # 64 MiB physical per TensorCore
    if "v5" in kind or "v6" in kind:
        return 100 * 1024 * 1024     # 128 MiB physical
    return None                      # unknown generation: default scoped limit


def _compiler_params(dim_sem):
    kwargs = dict(dimension_semantics=dim_sem)
    vmem = _vmem_limit_bytes()
    if vmem is not None:
        kwargs["vmem_limit_bytes"] = vmem
    return pltpu.CompilerParams(**kwargs)


def _choose_batch_block(batch, seq):
    """Rows per block ~ ROWS_TARGET for MXU/bandwidth, but keep nb >= 2
    whenever batch >= 2 so the second v7x TensorCore / megacore has work."""
    limit = batch if batch < 2 else max(1, batch // 2)
    bblk = min(limit, max(1, -(-ROWS_TARGET // seq)))
    while batch % bblk:
        bblk -= 1
    return bblk


def _choose_m_chunk(mlp_dim):
    """Largest divisor of mlp_dim <= M_CHUNK_TARGET (bounds VMEM intermediates)."""
    if mlp_dim <= M_CHUNK_TARGET:
        return mlp_dim
    for c in range(M_CHUNK_TARGET, 0, -1):
        if mlp_dim % c == 0:
            return c
    return mlp_dim


@functools.partial(jax.jit, static_argnames=("patch_size",))
def mlp_mix_forward(img, prepared, patch_size):
    # bf16 patches: halves the patch HBM->VMEM DMA (matmul runs in bf16 anyway).
    x = to_patches(img, patch_size).astype(MATMUL_DTYPE)     # (B, S, P)
    B, S, P = x.shape
    depth = prepared["lnw"].shape[0]
    C = prepared["ew"].shape[1]
    M = prepared["cw1t"].shape[1]

    bblk = _choose_batch_block(B, S)
    nb = B // bblk
    rows = bblk * S
    x = x.reshape(nb, rows, P)

    mchunk = _choose_m_chunk(M)
    n_mchunk = M // mchunk

    # ---- patch embedding (separate tiny kernel, hoisted out of depth loop) ----
    emb = pl.pallas_call(
        _patch_embed_kernel,
        out_shape=jax.ShapeDtypeStruct((nb, rows, C), jnp.float32),
        grid=(nb,),
        in_specs=[
            pl.BlockSpec((1, rows, P), lambda b: (b, 0, 0)),
            pl.BlockSpec((P, C), lambda b: (0, 0)),
            pl.BlockSpec((1, C), lambda b: (0, 0)),
        ],
        out_specs=pl.BlockSpec((1, rows, C), lambda b: (b, 0, 0)),
        compiler_params=_compiler_params(("parallel",)),
    )(x, prepared["ew"], prepared["eb"])

    # ---- fused depth loop ----
    out = pl.pallas_call(
        functools.partial(_mixer_layers_kernel, bblk=bblk, seq=S,
                          mchunk=mchunk, n_mchunk=n_mchunk),
        out_shape=jax.ShapeDtypeStruct((nb, rows, C), jnp.float32),
        grid=(nb, depth),
        in_specs=[
            pl.BlockSpec((1, rows, C), lambda b, d: (b, 0, 0)),   # embedding (resident)
            pl.BlockSpec((1, 1, C), lambda b, d: (d, 0, 0)),      # LN weight
            pl.BlockSpec((1, 1, C), lambda b, d: (d, 0, 0)),      # LN bias
            pl.BlockSpec((1, M, S), lambda b, d: (d, 0, 0)),      # cw1^T
            pl.BlockSpec((1, M, 1), lambda b, d: (d, 0, 0)),      # cb1
            pl.BlockSpec((1, S, M), lambda b, d: (d, 0, 0)),      # cw2^T
            pl.BlockSpec((1, S, 1), lambda b, d: (d, 0, 0)),      # cb2
            pl.BlockSpec((1, C, M), lambda b, d: (d, 0, 0)),      # tw1
            pl.BlockSpec((1, 1, M), lambda b, d: (d, 0, 0)),      # tb1
            pl.BlockSpec((1, M, C), lambda b, d: (d, 0, 0)),      # tw2
            pl.BlockSpec((1, 1, C), lambda b, d: (d, 0, 0)),      # tb2
        ],
        out_specs=pl.BlockSpec((1, rows, C), lambda b, d: (b, 0, 0)),
        scratch_shapes=[pltpu.VMEM((rows, C), MATMUL_DTYPE)],     # LN(x) for channel mix
        compiler_params=_compiler_params(("parallel", "arbitrary")),
    )(
        emb, prepared["lnw"], prepared["lnb"],
        prepared["cw1t"], prepared["cb1"], prepared["cw2t"], prepared["cb2"],
        prepared["tw1"], prepared["tb1"], prepared["tw2"], prepared["tb2"],
    )
    # DETECTION = True -> no mean-pool / mlp_head
    return out.reshape(B, S, C)


# ----------------------------------------------------------------------------
if __name__ == "__main__":
    image_size = 16
    patch_size = 4
    channels = 3
    dim = 32
    depth = 2
    mlp_dim = 32
    batch = 2

    key = jax.random.PRNGKey(0)
    k_img, k_par = jax.random.split(key)
    img = jax.random.normal(k_img, (batch, channels, image_size, image_size),
                            dtype=jnp.float32)
    params = init_params(k_par, image_size=image_size, patch_size=patch_size,
                         channels=channels, dim=dim, depth=depth, mlp_dim=mlp_dim)
    prepared = prepare_params(params)

    out = mlp_mix_forward(img, prepared, patch_size)
    jax.block_until_ready(out)

    expected_shape = (batch, (image_size // patch_size) ** 2, dim)
    assert out.shape == expected_shape, (out.shape, expected_shape)
    assert bool(jnp.all(jnp.isfinite(out)))
    print("KERNEL_OK")
</pallas_src>

<mosaic_0001>
module attributes {stable_mosaic.version = 11 : i64} {
  func.func @_patch_embed_kernel(%arg0: i32, %arg1: memref<1x16x48xbf16, #tpu.memory_space<vmem>>, %arg2: memref<48x32xbf16, #tpu.memory_space<vmem>>, %arg3: memref<1x32xf32, #tpu.memory_space<vmem>>, %arg4: memref<1x16x32xf32, #tpu.memory_space<vmem>>) attributes {dimension_semantics = [#tpu.dimension_semantics<parallel>], iteration_bounds = array<i64: 2>, scalar_prefetch = 0 : i64, scratch_operands = 0 : i64, tpu.core_type = #tpu.core_type<tc>, window_params = [{transform_indices = @transform_0, window_bounds = array<i64: 1, 16, 48>}, {pipeline_mode = #tpu.pipeline_mode<synchronous>, transform_indices = @transform_1, window_bounds = array<i64: 48, 32>}, {pipeline_mode = #tpu.pipeline_mode<synchronous>, transform_indices = @transform_2, window_bounds = array<i64: 1, 32>}, {transform_indices = @transform_3, window_bounds = array<i64: 1, 16, 32>}]} {
    %c0 = arith.constant 0 : index
    %c0_0 = arith.constant 0 : index
    %c0_1 = arith.constant 0 : index
    %0 = vector.load %arg1[%c0, %c0_0, %c0_1] : memref<1x16x48xbf16, #tpu.memory_space<vmem>>, vector<1x16x48xbf16>
    %1 = vector.shape_cast %0 : vector<1x16x48xbf16> to vector<16x48xbf16>
    %c0_2 = arith.constant 0 : index
    %c0_3 = arith.constant 0 : index
    %2 = vector.load %arg2[%c0_2, %c0_3] : memref<48x32xbf16, #tpu.memory_space<vmem>>, vector<48x32xbf16>
    %cst = arith.constant dense<0.000000e+00> : vector<16x32xf32>
    %3 = tpu.matmul %1, %2, %cst {dimension_numbers = #tpu.dot_dimension_numbers<[1], [0], [0], [1], [0, 0, 1, 1], [], []>} : vector<16x48xbf16>, vector<48x32xbf16>, vector<16x32xf32> -> vector<16x32xf32>
    %c0_4 = arith.constant 0 : index
    %c0_5 = arith.constant 0 : index
    %4 = vector.load %arg3[%c0_4, %c0_5] : memref<1x32xf32, #tpu.memory_space<vmem>>, vector<1x32xf32>
    %5 = vector.broadcast %4 : vector<1x32xf32> to vector<16x32xf32>
    %6 = arith.addf %3, %5 : vector<16x32xf32>
    %c0_6 = arith.constant 0 : index
    %c0_7 = arith.constant 0 : index
    %c0_8 = arith.constant 0 : index
    %7 = vector.load %arg4[%c0_6, %c0_7, %c0_8] : memref<1x16x32xf32, #tpu.memory_space<vmem>>, vector<1x16x32xf32>
    %8 = vector.shape_cast %7 : vector<1x16x32xf32> to vector<16x32xf32>
    %9 = vector.shape_cast %6 : vector<16x32xf32> to vector<1x16x32xf32>
    tpu.vector_store %arg4[%c0_6, %c0_7, %c0_8], %9 {strides = array<i32>} : memref<1x16x32xf32, #tpu.memory_space<vmem>>, vector<1x16x32xf32>,
    return
  }
  func.func @transform_0(%arg0: i32) -> (i32, i32, i32) {
    %c0_i32 = arith.constant 0 : i32
    %c0_i32_0 = arith.constant 0 : i32
    %c0_i32_1 = arith.constant 0 : i32
    return %arg0, %c0_i32, %c0_i32_0 : i32, i32, i32
  }
  func.func @transform_1(%arg0: i32) -> (i32, i32) {
    %c0_i32 = arith.constant 0 : i32
    %c0_i32_0 = arith.constant 0 : i32
    %c0_i32_1 = arith.constant 0 : i32
    return %c0_i32, %c0_i32_0 : i32, i32
  }
  func.func @transform_2(%arg0: i32) -> (i32, i32) {
    %c0_i32 = arith.constant 0 : i32
    %c0_i32_0 = arith.constant 0 : i32
    %c0_i32_1 = arith.constant 0 : i32
    return %c0_i32, %c0_i32_0 : i32, i32
  }
  func.func @transform_3(%arg0: i32) -> (i32, i32, i32) {
    %c0_i32 = arith.constant 0 : i32
    %c0_i32_0 = arith.constant 0 : i32
    %c0_i32_1 = arith.constant 0 : i32
    return %arg0, %c0_i32, %c0_i32_0 : i32, i32, i32
  }
}

module attributes {stable_mosaic.version = 11 : i64} {
  func.func @_mixer_layers_kernel(%arg0: i32, %arg1: i32, %arg2: memref<1x16x32xf32, #tpu.memory_space<vmem>>, %arg3: memref<1x1x32xf32, #tpu.memory_space<vmem>>, %arg4: memref<1x1x32xf32, #tpu.memory_space<vmem>>, %arg5: memref<1x32x16xbf16, #tpu.memory_space<vmem>>, %arg6: memref<1x32x1xf32, #tpu.memory_space<vmem>>, %arg7: memref<1x16x32xbf16, #tpu.memory_space<vmem>>, %arg8: memref<1x16x1xf32, #tpu.memory_space<vmem>>, %arg9: memref<1x32x32xbf16, #tpu.memory_space<vmem>>, %arg10: memref<1x1x32xf32, #tpu.memory_space<vmem>>, %arg11: memref<1x32x32xbf16, #tpu.memory_space<vmem>>, %arg12: memref<1x1x32xf32, #tpu.memory_space<vmem>>, %arg13: memref<1x16x32xf32, #tpu.memory_space<vmem>>, %arg14: memref<16x32xbf16, #tpu.memory_space<vmem>>) attributes {dimension_semantics = [#tpu.dimension_semantics<parallel>, #tpu.dimension_semantics<arbitrary>], iteration_bounds = array<i64: 2, 2>, scalar_prefetch = 0 : i64, scratch_operands = 1 : i64, tpu.core_type = #tpu.core_type<tc>, window_params = [{transform_indices = @transform_0, window_bounds = array<i64: 1, 16, 32>}, {transform_indices = @transform_1, window_bounds = array<i64: 1, 1, 32>}, {transform_indices = @transform_2, window_bounds = array<i64: 1, 1, 32>}, {transform_indices = @transform_3, window_bounds = array<i64: 1, 32, 16>}, {transform_indices = @transform_4, window_bounds = array<i64: 1, 32, 1>}, {transform_indices = @transform_5, window_bounds = array<i64: 1, 16, 32>}, {transform_indices = @transform_6, window_bounds = array<i64: 1, 16, 1>}, {transform_indices = @transform_7, window_bounds = array<i64: 1, 32, 32>}, {transform_indices = @transform_8, window_bounds = array<i64: 1, 1, 32>}, {transform_indices = @transform_9, window_bounds = array<i64: 1, 32, 32>}, {transform_indices = @transform_10, window_bounds = array<i64: 1, 1, 32>}, {transform_indices = @transform_11, window_bounds = array<i64: 1, 16, 32>}]} {
    %c0_i32 = arith.constant 0 : i32
    %0 = arith.cmpi eq, %arg1, %c0_i32 : i32
    %1 = arith.extui %0 : i1 to i32
    %c0_i32_0 = arith.constant 0 : i32
    %2 = arith.cmpi ne, %1, %c0_i32_0 : i32
    scf.if %2 {
      %c0_72 = arith.constant 0 : index
      %c0_73 = arith.constant 0 : index
      %c0_74 = arith.constant 0 : index
      %122 = vector.load %arg2[%c0_72, %c0_73, %c0_74] : memref<1x16x32xf32, #tpu.memory_space<vmem>>, vector<1x16x32xf32>
      %123 = vector.shape_cast %122 : vector<1x16x32xf32> to vector<16x32xf32>
      %c0_75 = arith.constant 0 : index
      %c0_76 = arith.constant 0 : index
      %c0_77 = arith.constant 0 : index
      %124 = vector.load %arg13[%c0_75, %c0_76, %c0_77] : memref<1x16x32xf32, #tpu.memory_space<vmem>>, vector<1x16x32xf32>
      %125 = vector.shape_cast %124 : vector<1x16x32xf32> to vector<16x32xf32>
      %126 = vector.shape_cast %123 : vector<16x32xf32> to vector<1x16x32xf32>
      tpu.vector_store %arg13[%c0_75, %c0_76, %c0_77], %126 {strides = array<i32>} : memref<1x16x32xf32, #tpu.memory_space<vmem>>, vector<1x16x32xf32>,
    } else {
    }
    %c0 = arith.constant 0 : index
    %c0_1 = arith.constant 0 : index
    %c0_2 = arith.constant 0 : index
    %3 = vector.load %arg3[%c0, %c0_1, %c0_2] : memref<1x1x32xf32, #tpu.memory_space<vmem>>, vector<1x1x32xf32>
    %4 = vector.shape_cast %3 : vector<1x1x32xf32> to vector<1x32xf32>
    %c0_3 = arith.constant 0 : index
    %c0_4 = arith.constant 0 : index
    %c0_5 = arith.constant 0 : index
    %5 = vector.load %arg4[%c0_3, %c0_4, %c0_5] : memref<1x1x32xf32, #tpu.memory_space<vmem>>, vector<1x1x32xf32>
    %6 = vector.shape_cast %5 : vector<1x1x32xf32> to vector<1x32xf32>
    %c0_6 = arith.constant 0 : index
    %c0_7 = arith.constant 0 : index
    %c0_8 = arith.constant 0 : index
    %7 = vector.load %arg13[%c0_6, %c0_7, %c0_8] : memref<1x16x32xf32, #tpu.memory_space<vmem>>, vector<1x16x32xf32>
    %8 = vector.shape_cast %7 : vector<1x16x32xf32> to vector<16x32xf32>
    %cst = arith.constant dense<0.000000e+00> : vector<16xf32>
    %9 = vector.multi_reduction <add>, %8, %cst [1] : vector<16x32xf32> to vector<16xf32>
    %10 = vector.shape_cast %9 : vector<16xf32> to vector<16x1xf32>
    %cst_9 = arith.constant 3.200000e+01 : f32
    %11 = vector.broadcast %cst_9 : f32 to vector<16x1xf32>
    %12 = arith.divf %10, %11 : vector<16x1xf32>
    %13 = arith.mulf %8, %8 : vector<16x32xf32>
    %cst_10 = arith.constant dense<0.000000e+00> : vector<16xf32>
    %14 = vector.multi_reduction <add>, %13, %cst_10 [1] : vector<16x32xf32> to vector<16xf32>
    %15 = vector.shape_cast %14 : vector<16xf32> to vector<16x1xf32>
    %cst_11 = arith.constant 3.200000e+01 : f32
    %16 = vector.broadcast %cst_11 : f32 to vector<16x1xf32>
    %17 = arith.divf %15, %16 : vector<16x1xf32>
    %18 = arith.mulf %12, %12 : vector<16x1xf32>
    %19 = arith.subf %17, %18 : vector<16x1xf32>
    %cst_12 = arith.constant 0.000000e+00 : f32
    %20 = vector.broadcast %cst_12 : f32 to vector<16x1xf32>
    %21 = arith.maximumf %19, %20 : vector<16x1xf32>
    %22 = vector.broadcast %12 : vector<16x1xf32> to vector<16x32xf32>
    %23 = arith.subf %8, %22 : vector<16x32xf32>
    %cst_13 = arith.constant 9.99999974E-6 : f32
    %24 = vector.broadcast %cst_13 : f32 to vector<16x1xf32>
    %25 = arith.addf %21, %24 : vector<16x1xf32>
    %26 = math.rsqrt %25 : vector<16x1xf32>
    %27 = vector.broadcast %26 : vector<16x1xf32> to vector<16x32xf32>
    %28 = arith.mulf %23, %27 : vector<16x32xf32>
    %29 = vector.broadcast %4 : vector<1x32xf32> to vector<16x32xf32>
    %30 = arith.mulf %28, %29 : vector<16x32xf32>
    %31 = vector.broadcast %6 : vector<1x32xf32> to vector<16x32xf32>
    %32 = arith.addf %30, %31 : vector<16x32xf32>
    %33 = arith.truncf %32 : vector<16x32xf32> to vector<16x32xbf16>
    %c0_14 = arith.constant 0 : index
    %c0_15 = arith.constant 0 : index
    %34 = vector.load %arg14[%c0_14, %c0_15] : memref<16x32xbf16, #tpu.memory_space<vmem>>, vector<16x32xbf16>
    tpu.vector_store %arg14[%c0_14, %c0_15], %33 {strides = array<i32>} : memref<16x32xbf16, #tpu.memory_space<vmem>>, vector<16x32xbf16>,
    %c0_16 = arith.constant 0 : index
    %c0_17 = arith.constant 0 : index
    %35 = vector.load %arg14[%c0_16, %c0_17] : memref<16x32xbf16, #tpu.memory_space<vmem>>, vector<16x32xbf16>
    %cst_18 = arith.constant 0.000000e+00 : f32
    %36 = vector.broadcast %cst_18 : f32 to vector<16x32xf32>
    %c0_19 = arith.constant 0 : index
    %c0_20 = arith.constant 0 : index
    %c0_21 = arith.constant 0 : index
    %37 = vector.load %arg5[%c0_19, %c0_20, %c0_21] : memref<1x32x16xbf16, #tpu.memory_space<vmem>>, vector<1x32x16xbf16>
    %38 = vector.shape_cast %37 : vector<1x32x16xbf16> to vector<32x16xbf16>
    %c0_22 = arith.constant 0 : index
    %c0_23 = arith.constant 0 : index
    %c0_24 = arith.constant 0 : index
    %39 = vector.load %arg6[%c0_22, %c0_23, %c0_24] : memref<1x32x1xf32, #tpu.memory_space<vmem>>, vector<1x32x1xf32>
    %40 = vector.shape_cast %39 : vector<1x32x1xf32> to vector<32x1xf32>
    %cst_25 = arith.constant dense<0.000000e+00> : vector<32x32xf32>
    %41 = tpu.matmul %38, %35, %cst_25 {dimension_numbers = #tpu.dot_dimension_numbers<[1], [0], [0], [1], [0, 0, 1, 1], [], []>} : vector<32x16xbf16>, vector<16x32xbf16>, vector<32x32xf32> -> vector<32x32xf32>
    %42 = vector.broadcast %40 : vector<32x1xf32> to vector<32x32xf32>
    %43 = arith.addf %41, %42 : vector<32x32xf32>
    %cst_26 = arith.constant 5.000000e-01 : f32
    %44 = vector.broadcast %cst_26 : f32 to vector<32x32xf32>
    %45 = arith.mulf %44, %43 : vector<32x32xf32>
    %cst_27 = arith.constant 0.707106769 : f32
    %46 = vector.broadcast %cst_27 : f32 to vector<32x32xf32>
    %47 = arith.mulf %43, %46 : vector<32x32xf32>
    %48 = math.erf %47 : vector<32x32xf32>
    %cst_28 = arith.constant 1.000000e+00 : f32
    %49 = vector.broadcast %cst_28 : f32 to vector<32x32xf32>
    %50 = arith.addf %49, %48 : vector<32x32xf32>
    %51 = arith.mulf %45, %50 : vector<32x32xf32>
    %52 = arith.truncf %51 : vector<32x32xf32> to vector<32x32xbf16>
    %c0_29 = arith.constant 0 : index
    %c0_30 = arith.constant 0 : index
    %c0_31 = arith.constant 0 : index
    %53 = vector.load %arg7[%c0_29, %c0_30, %c0_31] : memref<1x16x32xbf16, #tpu.memory_space<vmem>>, vector<1x16x32xbf16>
    %54 = vector.shape_cast %53 : vector<1x16x32xbf16> to vector<16x32xbf16>
    %cst_32 = arith.constant dense<0.000000e+00> : vector<16x32xf32>
    %55 = tpu.matmul %54, %52, %cst_32 {dimension_numbers = #tpu.dot_dimension_numbers<[1], [0], [0], [1], [0, 0, 1, 1], [], []>} : vector<16x32xbf16>, vector<32x32xbf16>, vector<16x32xf32> -> vector<16x32xf32>
    %56 = arith.addf %36, %55 : vector<16x32xf32>
    %c0_33 = arith.constant 0 : index
    %c0_34 = arith.constant 0 : index
    %c0_35 = arith.constant 0 : index
    %57 = vector.load %arg13[%c0_33, %c0_34, %c0_35] : memref<1x16x32xf32, #tpu.memory_space<vmem>>, vector<1x16x32xf32>
    %58 = vector.shape_cast %57 : vector<1x16x32xf32> to vector<16x32xf32>
    %c0_36 = arith.constant 0 : index
    %c0_37 = arith.constant 0 : index
    %c0_38 = arith.constant 0 : index
    %59 = vector.load %arg8[%c0_36, %c0_37, %c0_38] : memref<1x16x1xf32, #tpu.memory_space<vmem>>, vector<1x16x1xf32>
    %60 = vector.shape_cast %59 : vector<1x16x1xf32> to vector<16x1xf32>
    %61 = vector.broadcast %60 : vector<16x1xf32> to vector<16x32xf32>
    %62 = arith.addf %56, %61 : vector<16x32xf32>
    %63 = arith.addf %58, %62 : vector<16x32xf32>
    %c0_39 = arith.constant 0 : index
    %c0_40 = arith.constant 0 : index
    %c0_41 = arith.constant 0 : index
    %64 = vector.load %arg13[%c0_39, %c0_40, %c0_41] : memref<1x16x32xf32, #tpu.memory_space<vmem>>, vector<1x16x32xf32>
    %65 = vector.shape_cast %64 : vector<1x16x32xf32> to vector<16x32xf32>
    %66 = vector.shape_cast %63 : vector<16x32xf32> to vector<1x16x32xf32>
    tpu.vector_store %arg13[%c0_39, %c0_40, %c0_41], %66 {strides = array<i32>} : memref<1x16x32xf32, #tpu.memory_space<vmem>>, vector<1x16x32xf32>,
    %c0_42 = arith.constant 0 : index
    %c0_43 = arith.constant 0 : index
    %c0_44 = arith.constant 0 : index
    %67 = vector.load %arg13[%c0_42, %c0_43, %c0_44] : memref<1x16x32xf32, #tpu.memory_space<vmem>>, vector<1x16x32xf32>
    %68 = vector.shape_cast %67 : vector<1x16x32xf32> to vector<16x32xf32>
    %cst_45 = arith.constant dense<0.000000e+00> : vector<16xf32>
    %69 = vector.multi_reduction <add>, %68, %cst_45 [1] : vector<16x32xf32> to vector<16xf32>
    %70 = vector.shape_cast %69 : vector<16xf32> to vector<16x1xf32>
    %cst_46 = arith.constant 3.200000e+01 : f32
    %71 = vector.broadcast %cst_46 : f32 to vector<16x1xf32>
    %72 = arith.divf %70, %71 : vector<16x1xf32>
    %73 = arith.mulf %68, %68 : vector<16x32xf32>
    %cst_47 = arith.constant dense<0.000000e+00> : vector<16xf32>
    %74 = vector.multi_reduction <add>, %73, %cst_47 [1] : vector<16x32xf32> to vector<16xf32>
    %75 = vector.shape_cast %74 : vector<16xf32> to vector<16x1xf32>
    %cst_48 = arith.constant 3.200000e+01 : f32
    %76 = vector.broadcast %cst_48 : f32 to vector<16x1xf32>
    %77 = arith.divf %75, %76 : vector<16x1xf32>
    %78 = arith.mulf %72, %72 : vector<16x1xf32>
    %79 = arith.subf %77, %78 : vector<16x1xf32>
    %cst_49 = arith.constant 0.000000e+00 : f32
    %80 = vector.broadcast %cst_49 : f32 to vector<16x1xf32>
    %81 = arith.maximumf %79, %80 : vector<16x1xf32>
    %82 = vector.broadcast %72 : vector<16x1xf32> to vector<16x32xf32>
    %83 = arith.subf %68, %82 : vector<16x32xf32>
    %cst_50 = arith.constant 9.99999974E-6 : f32
    %84 = vector.broadcast %cst_50 : f32 to vector<16x1xf32>
    %85 = arith.addf %81, %84 : vector<16x1xf32>
    %86 = math.rsqrt %85 : vector<16x1xf32>
    %87 = vector.broadcast %86 : vector<16x1xf32> to vector<16x32xf32>
    %88 = arith.mulf %83, %87 : vector<16x32xf32>
    %89 = vector.broadcast %4 : vector<1x32xf32> to vector<16x32xf32>
    %90 = arith.mulf %88, %89 : vector<16x32xf32>
    %91 = vector.broadcast %6 : vector<1x32xf32> to vector<16x32xf32>
    %92 = arith.addf %90, %91 : vector<16x32xf32>
    %93 = arith.truncf %92 : vector<16x32xf32> to vector<16x32xbf16>
    %cst_51 = arith.constant 0.000000e+00 : f32
    %94 = vector.broadcast %cst_51 : f32 to vector<16x32xf32>
    %c0_52 = arith.constant 0 : index
    %c0_53 = arith.constant 0 : index
    %c0_54 = arith.constant 0 : index
    %95 = vector.load %arg9[%c0_52, %c0_53, %c0_54] : memref<1x32x32xbf16, #tpu.memory_space<vmem>>, vector<1x32x32xbf16>
    %96 = vector.shape_cast %95 : vector<1x32x32xbf16> to vector<32x32xbf16>
    %c0_55 = arith.constant 0 : index
    %c0_56 = arith.constant 0 : index
    %c0_57 = arith.constant 0 : index
    %97 = vector.load %arg10[%c0_55, %c0_56, %c0_57] : memref<1x1x32xf32, #tpu.memory_space<vmem>>, vector<1x1x32xf32>
    %98 = vector.shape_cast %97 : vector<1x1x32xf32> to vector<1x32xf32>
    %cst_58 = arith.constant dense<0.000000e+00> : vector<16x32xf32>
    %99 = tpu.matmul %93, %96, %cst_58 {dimension_numbers = #tpu.dot_dimension_numbers<[1], [0], [0], [1], [0, 0, 1, 1], [], []>} : vector<16x32xbf16>, vector<32x32xbf16>, vector<16x32xf32> -> vector<16x32xf32>
    %100 = vector.broadcast %98 : vector<1x32xf32> to vector<16x32xf32>
    %101 = arith.addf %99, %100 : vector<16x32xf32>
    %cst_59 = arith.constant 5.000000e-01 : f32
    %102 = vector.broadcast %cst_59 : f32 to vector<16x32xf32>
    %103 = arith.mulf %102, %101 : vector<16x32xf32>
    %cst_60 = arith.constant 0.707106769 : f32
    %104 = vector.broadcast %cst_60 : f32 to vector<16x32xf32>
    %105 = arith.mulf %101, %104 : vector<16x32xf32>
    %106 = math.erf %105 : vector<16x32xf32>
    %cst_61 = arith.constant 1.000000e+00 : f32
    %107 = vector.broadcast %cst_61 : f32 to vector<16x32xf32>
    %108 = arith.addf %107, %106 : vector<16x32xf32>
    %109 = arith.mulf %103, %108 : vector<16x32xf32>
    %110 = arith.truncf %109 : vector<16x32xf32> to vector<16x32xbf16>
    %c0_62 = arith.constant 0 : index
    %c0_63 = arith.constant 0 : index
    %c0_64 = arith.constant 0 : index
    %111 = vector.load %arg11[%c0_62, %c0_63, %c0_64] : memref<1x32x32xbf16, #tpu.memory_space<vmem>>, vector<1x32x32xbf16>
    %112 = vector.shape_cast %111 : vector<1x32x32xbf16> to vector<32x32xbf16>
    %cst_65 = arith.constant dense<0.000000e+00> : vector<16x32xf32>
    %113 = tpu.matmul %110, %112, %cst_65 {dimension_numbers = #tpu.dot_dimension_numbers<[1], [0], [0], [1], [0, 0, 1, 1], [], []>} : vector<16x32xbf16>, vector<32x32xbf16>, vector<16x32xf32> -> vector<16x32xf32>
    %114 = arith.addf %94, %113 : vector<16x32xf32>
    %c0_66 = arith.constant 0 : index
    %c0_67 = arith.constant 0 : index
    %c0_68 = arith.constant 0 : index
    %115 = vector.load %arg12[%c0_66, %c0_67, %c0_68] : memref<1x1x32xf32, #tpu.memory_space<vmem>>, vector<1x1x32xf32>
    %116 = vector.shape_cast %115 : vector<1x1x32xf32> to vector<1x32xf32>
    %117 = vector.broadcast %116 : vector<1x32xf32> to vector<16x32xf32>
    %118 = arith.addf %114, %117 : vector<16x32xf32>
    %c0_69 = arith.constant 0 : index
    %c0_70 = arith.constant 0 : index
    %c0_71 = arith.constant 0 : index
    %119 = vector.load %arg13[%c0_69, %c0_70, %c0_71] : memref<1x16x32xf32, #tpu.memory_space<vmem>>, vector<1x16x32xf32>
    %120 = vector.shape_cast %119 : vector<1x16x32xf32> to vector<16x32xf32>
    %121 = vector.shape_cast %118 : vector<16x32xf32> to vector<1x16x32xf32>
    tpu.vector_store %arg13[%c0_69, %c0_70, %c0_71], %121 {strides = array<i32>} : memref<1x16x32xf32, #tpu.memory_space<vmem>>, vector<1x16x32xf32>,
    return
  }
  func.func @transform_0(%arg0: i32, %arg1: i32) -> (i32, i32, i32) {
    %c0_i32 = arith.constant 0 : i32
    %c0_i32_0 = arith.constant 0 : i32
    %c0_i32_1 = arith.constant 0 : i32
    return %arg0, %c0_i32, %c0_i32_0 : i32, i32, i32
  }
  func.func @transform_1(%arg0: i32, %arg1: i32) -> (i32, i32, i32) {
    %c0_i32 = arith.constant 0 : i32
    %c0_i32_0 = arith.constant 0 : i32
    %c0_i32_1 = arith.constant 0 : i32
    return %arg1, %c0_i32, %c0_i32_0 : i32, i32, i32
  }
  func.func @transform_2(%arg0: i32, %arg1: i32) -> (i32, i32, i32) {
    %c0_i32 = arith.constant 0 : i32
    %c0_i32_0 = arith.constant 0 : i32
    %c0_i32_1 = arith.constant 0 : i32
    return %arg1, %c0_i32, %c0_i32_0 : i32, i32, i32
  }
  func.func @transform_3(%arg0: i32, %arg1: i32) -> (i32, i32, i32) {
    %c0_i32 = arith.constant 0 : i32
    %c0_i32_0 = arith.constant 0 : i32
    %c0_i32_1 = arith.constant 0 : i32
    return %arg1, %c0_i32, %c0_i32_0 : i32, i32, i32
  }
  func.func @transform_4(%arg0: i32, %arg1: i32) -> (i32, i32, i32) {
    %c0_i32 = arith.constant 0 : i32
    %c0_i32_0 = arith.constant 0 : i32
    %c0_i32_1 = arith.constant 0 : i32
    return %arg1, %c0_i32, %c0_i32_0 : i32, i32, i32
  }
  func.func @transform_5(%arg0: i32, %arg1: i32) -> (i32, i32, i32) {
    %c0_i32 = arith.constant 0 : i32
    %c0_i32_0 = arith.constant 0 : i32
    %c0_i32_1 = arith.constant 0 : i32
    return %arg1, %c0_i32, %c0_i32_0 : i32, i32, i32
  }
  func.func @transform_6(%arg0: i32, %arg1: i32) -> (i32, i32, i32) {
    %c0_i32 = arith.constant 0 : i32
    %c0_i32_0 = arith.constant 0 : i32
    %c0_i32_1 = arith.constant 0 : i32
    return %arg1, %c0_i32, %c0_i32_0 : i32, i32, i32
  }
  func.func @transform_7(%arg0: i32, %arg1: i32) -> (i32, i32, i32) {
    %c0_i32 = arith.constant 0 : i32
    %c0_i32_0 = arith.constant 0 : i32
    %c0_i32_1 = arith.constant 0 : i32
    return %arg1, %c0_i32, %c0_i32_0 : i32, i32, i32
  }
  func.func @transform_8(%arg0: i32, %arg1: i32) -> (i32, i32, i32) {
    %c0_i32 = arith.constant 0 : i32
    %c0_i32_0 = arith.constant 0 : i32
    %c0_i32_1 = arith.constant 0 : i32
    return %arg1, %c0_i32, %c0_i32_0 : i32, i32, i32
  }
  func.func @transform_9(%arg0: i32, %arg1: i32) -> (i32, i32, i32) {
    %c0_i32 = arith.constant 0 : i32
    %c0_i32_0 = arith.constant 0 : i32
    %c0_i32_1 = arith.constant 0 : i32
    return %arg1, %c0_i32, %c0_i32_0 : i32, i32, i32
  }
  func.func @transform_10(%arg0: i32, %arg1: i32) -> (i32, i32, i32) {
    %c0_i32 = arith.constant 0 : i32
    %c0_i32_0 = arith.constant 0 : i32
    %c0_i32_1 = arith.constant 0 : i32
    return %arg1, %c0_i32, %c0_i32_0 : i32, i32, i32
  }
  func.func @transform_11(%arg0: i32, %arg1: i32) -> (i32, i32, i32) {
    %c0_i32 = arith.constant 0 : i32
    %c0_i32_0 = arith.constant 0 : i32
    %c0_i32_1 = arith.constant 0 : i32
    return %arg0, %c0_i32, %c0_i32_0 : i32, i32, i32
  }
}

</mosaic_0001>

<llo_original>
// kernel: mlp_mix_forward.2
$region0: #{mlp_mix_forward.2}
  #allocation0 [shape = 'u32[]', space=smem, size = 0x4, offset = 0x4, fixed_abs, tag = 'smem constant byte address 0x4 - core index']
  #allocation1 [shape = 'u32[144,128]{1,0:T(1,128)}', space=vmem, size = 0x12000, scoped, tag = 'internal scratch']
  %s0 = inlined_call_operand.vmem [shape: bf16[2,16,48], index: 0, kind: input, shape index: {}]
  %s1 = inlined_call_operand.vmem [shape: bf16[48,32], index: 1, kind: input, shape index: {}]
  %s2 = inlined_call_operand.vmem [shape: f32[1,32], index: 2, kind: input, shape index: {}]
  %s3 = inlined_call_operand.vmem [shape: f32[2,16,32], index: 3, kind: output, shape index: {}]
  %s4 = sld [smem:[#allocation0]]
  $region45: #{mlp_mix_forward.2} parent=0
    _
  %s6 = ssub.s32 1, %s4
  %s7 = scalar_select 0, %s6, %s4
  loop: start=0, step=1, limit=4
  $region2: #{mlp_mix_forward.2} parent=0 // loop_pre_header
    _
  $region3: #{mlp_mix_forward.2} parent=0 // loop_header
    %s9 = sphi 0, %s13
    %p10 = scmp.ge.s32.totalorder %s9, 4
    %s19 = sphi 0, %s21
    %s22 = sphi 0, %s19
    %s23 = sphi 0, %s22
    %s39 = sphi 0, %s23
    %s43 = sphi 0, %s43
    %s45 = sphi 0, %s43
    %s46 = sphi 0, %s45
    %s60 = sphi 0, %s46
    %s64 = sphi 0, %s64
    %s66 = sphi 0, %s64
    %s67 = sphi 0, %s66
    %s81 = sphi 0, %s67
    %s87 = sphi 0, %s89
    %s90 = sphi 0, %s87
    %s91 = sphi 0, %s90
    %s107 = sphi 0, %s91
  $region4: #{mlp_mix_forward.2} parent=0 // loop_header_branch
    %12 = sbr.rel (%p10) target = $region8
  $region5: #{mlp_mix_forward.2} parent=0 // loop_body
    %s14 = ssub.s32 %s9, 1
    %s15 = ssub.s32 %s9, 2
    %s16 = sadd.s32 %s9, 1
    %s17 = ssub.s32 %s9, %s16
    %p18 = scmp.eq.s32.totalorder %s17, 0
    %s20 = sadd.s32 %s19, 1
    %s21 = scalar_select %p18, %s19, %s20
    %p24 = pneg %p18
    %p25 = scmp.eq.s32.totalorder %s9, 1
    %p26 = por %p24, %p25
    %p27 = scmp.ne.s32.totalorder %s19, %s22
    %p28 = scmp.eq.s32.totalorder %s9, 0
    %p29 = por %p27, %p28
    %p30 = scmp.ne.s32.totalorder %s19, %s22
    %p31 = scmp.eq.s32.totalorder %s14, 1
    %p32 = por %p30, %p31
    %p33 = scmp.ne.s32.totalorder %s22, %s23
    %p34 = scmp.eq.s32.totalorder %s14, 0
    %p35 = por %p33, %p34
    %p36 = scmp.ne.s32.totalorder %s22, %s23
    %p37 = scmp.eq.s32.totalorder %s15, 1
    %p38 = por %p36, %p37
    %p40 = scmp.ne.s32.totalorder %s23, %s39
    %p41 = scmp.eq.s32.totalorder %s15, 0
    %p42 = por %p40, %p41
    %s44 = sadd.s32 %s43, 1
    %p47 = scmp.eq.s32.totalorder %s9, 1
    %p48 = scmp.ne.s32.totalorder %s43, %s45
    %p49 = scmp.eq.s32.totalorder %s9, 0
    %p50 = por %p48, %p49
    %p51 = scmp.ne.s32.totalorder %s43, %s45
    %p52 = scmp.eq.s32.totalorder %s14, 1
    %p53 = por %p51, %p52
    %p54 = scmp.ne.s32.totalorder %s45, %s46
    %p55 = scmp.eq.s32.totalorder %s14, 0
    %p56 = por %p54, %p55
    %p57 = scmp.ne.s32.totalorder %s45, %s46
    %p58 = scmp.eq.s32.totalorder %s15, 1
    %p59 = por %p57, %p58
    %p61 = scmp.ne.s32.totalorder %s46, %s60
    %p62 = scmp.eq.s32.totalorder %s15, 0
    %p63 = por %p61, %p62
    %s65 = sadd.s32 %s64, 1
    %p68 = scmp.eq.s32.totalorder %s9, 1
    %p69 = scmp.ne.s32.totalorder %s64, %s66
    %p70 = scmp.eq.s32.totalorder %s9, 0
    %p71 = por %p69, %p70
    %p72 = scmp.ne.s32.totalorder %s64, %s66
    %p73 = scmp.eq.s32.totalorder %s14, 1
    %p74 = por %p72, %p73
    %p75 = scmp.ne.s32.totalorder %s66, %s67
    %p76 = scmp.eq.s32.totalorder %s14, 0
    %p77 = por %p75, %p76
    %p78 = scmp.ne.s32.totalorder %s66, %s67
    %p79 = scmp.eq.s32.totalorder %s15, 1
    %p80 = por %p78, %p79
    %p82 = scmp.ne.s32.totalorder %s67, %s81
    %p83 = scmp.eq.s32.totalorder %s15, 0
    %p84 = por %p82, %p83
    %s85 = ssub.s32 %s9, %s16
    %p86 = scmp.eq.s32.totalorder %s85, 0
    %s88 = sadd.s32 %s87, 1
    %s89 = scalar_select %p86, %s87, %s88
    %p92 = pneg %p86
    %p93 = scmp.eq.s32.totalorder %s9, 1
    %p94 = por %p92, %p93
    %p95 = scmp.ne.s32.totalorder %s87, %s90
    %p96 = scmp.eq.s32.totalorder %s9, 0
    %p97 = por %p95, %p96
    %p98 = scmp.ne.s32.totalorder %s87, %s90
    %p99 = scmp.eq.s32.totalorder %s14, 1
    %p100 = por %p98, %p99
    %p101 = scmp.ne.s32.totalorder %s90, %s91
    %p102 = scmp.eq.s32.totalorder %s14, 0
    %p103 = por %p101, %p102
    %p104 = scmp.ne.s32.totalorder %s90, %s91
    %p105 = scmp.eq.s32.totalorder %s15, 1
    %p106 = por %p104, %p105
    %p108 = scmp.ne.s32.totalorder %s91, %s107
    %p109 = scmp.eq.s32.totalorder %s15, 0
    %p110 = por %p108, %p109
    %p111 = scmp.le.s32.totalorder 1, %s9
    %p112 = scmp.lt.s32.totalorder %s9, 3
    %p113 = pnand %p111, %p112
    %p114 = pneg %p113
    // Predicated region
    $region9: #{mlp_mix_forward.2} parent=5 // pred_check
      _
    $region10: #{mlp_mix_forward.2} parent=5 // pred_check_branch
      %116 = sbr.rel (%p113) target = $region12
    $region11: #{mlp_mix_forward.2} parent=5 // pred_region
      %s117 = ssub.s32 %s9, 1
      // Predicated region
      $region13: #{mlp_mix_forward.2} parent=11 // pred_check
        %p118 = pneg %p56
      $region14: #{mlp_mix_forward.2} parent=11 // pred_check_branch
        %120 = sbr.rel (%p118) target = $region16
      $region15: #{mlp_mix_forward.2} parent=11 // pred_region
        _
      $region16: #{mlp_mix_forward.2} parent=11 // pred_fallthru
        _
      // Predicated region
      $region17: #{mlp_mix_forward.2} parent=11 // pred_check
        %p121 = pneg %p77
      $region18: #{mlp_mix_forward.2} parent=11 // pred_check_branch
        %123 = sbr.rel (%p121) target = $region20
      $region19: #{mlp_mix_forward.2} parent=11 // pred_region
        _
      $region20: #{mlp_mix_forward.2} parent=11 // pred_fallthru
        _
    $region12: #{mlp_mix_forward.2} parent=5 // pred_fallthru
      _
    %p124 = scmp.lt.s32.totalorder %s9, 2
    // Predicated region
    $region21: #{mlp_mix_forward.2} parent=5 // pred_check
      %p125 = pneg %p124
    $region22: #{mlp_mix_forward.2} parent=5 // pred_check_branch
      %127 = sbr.rel (%p125) target = $region24
    $region23: #{mlp_mix_forward.2} parent=5 // pred_region
      // Predicated region
      $region25: #{mlp_mix_forward.2} parent=23 // pred_check
        %p128 = pneg %p29
      $region26: #{mlp_mix_forward.2} parent=23 // pred_check_branch
        %130 = sbr.rel (%p128) target = $region28
      $region27: #{mlp_mix_forward.2} parent=23 // pred_region
        %p131 = scmp.lt.s32.totalorder %s9, 1
        %s132 = scalar_select %p131, %s9, 1
        %s133 = smul.addr %s132, 2
        %s134 = smul.addr %s133, 4
        %s135 = scalar_lea.vmem %s0, %s134
      $region28: #{mlp_mix_forward.2} parent=23 // pred_fallthru
        _
    $region24: #{mlp_mix_forward.2} parent=5 // pred_fallthru
      _
    %p136 = scmp.le.s32.totalorder 1, %s9
    %p137 = scmp.lt.s32.totalorder %s9, 3
    %p138 = pnand %p136, %p137
    %p139 = pneg %p138
    // Predicated region
    $region29: #{mlp_mix_forward.2} parent=5 // pred_check
      _
    $region30: #{mlp_mix_forward.2} parent=5 // pred_check_branch
      %141 = sbr.rel (%p138) target = $region32
    $region31: #{mlp_mix_forward.2} parent=5 // pred_region
      %s142 = ssub.s32 %s9, 1
      %p143 = scmp.lt.s32.totalorder %s14, 1
      %s144 = scalar_select %p143, %s14, 1
      %s145 = smul.addr %s144, 2
      %s146 = smul.addr %s145, 4
      %s147 = scalar_lea.vmem %s0, %s146
      %p148 = pneg %p35
      %p149 = pneg %p32
      %p150 = pneg %p56
      %p151 = pneg %p53
      %p152 = pneg %p77
      %p153 = pneg %p74
      %p154 = pneg %p103
      %p155 = pneg %p100
      %p156 = scmp.lt.s32.totalorder %s14, 1
      %s157 = scalar_select %p156, %s14, 1
      %s158 = smul.addr %s157, 2
      %s159 = smul.addr %s158, 8
      %s160 = scalar_lea.vmem %s3, %s159
      %p161 = scmp.lt.s32.totalorder %s14, 1
      %s162 = scalar_select %p161, %s14, 1
      %s163 = smul.addr %s162, 2
      %s164 = smul.addr %s163, 4
      %s165 = scalar_lea.vmem %s0, %s164
      %p166 = scmp.lt.s32.totalorder %s14, 1
      %s167 = scalar_select %p166, %s14, 1
      %s168 = smul.addr %s167, 2
      %s169 = smul.addr %s168, 8
      %s170 = scalar_lea.vmem %s3, %s169
      %v172 = vld [vmem:[%s165] sm:$0xf]
      %v173 = vld [vmem:[%s165 + $0x4] sm:$0xf]
      %v174 = vld [vmem:[%s1] sm:$0xf]
      %v175 = vld [vmem:[%s1 + $0x4] sm:$0xf]
      %v176 = vld [vmem:[%s1 + $0x8] sm:$0xf]
      %v177 = vld [vmem:[%s1 + $0xc] sm:$0xf]
      %v178 = vld [vmem:[%s1 + $0x10] sm:$0xf]
      %v179 = vld [vmem:[%s1 + $0x14] sm:$0xf]
      %v180 = vld [vmem:[%s2] sm:$0x1]
      %v182 = vlaneseq
      %v183 = vshrl.u32 %v182, 7
      %v184 = vsub.s32 0, %v183
      %v185 = vrot.slane %v180, %v184
      %v189 = vunpack.c.l.b16 %v172
      %v190 = vunpack.c.l.b16 %v173
      %v191 = vpack.c.b16 %v190, %v189
      %v198 = vunpack.c.l.b16 %v174
      %v199 = vunpack.c.l.b16 %v175
      %v200 = vunpack.c.l.b16 %v176
      %v201 = vunpack.c.l.b16 %v177
      %v202 = vunpack.c.l.b16 %v178
      %v203 = vunpack.c.l.b16 %v179
      %v204 = vpack.c.b16 %v199, %v198
      %v205 = vpack.c.b16 %v201, %v200
      %v206 = vpack.c.b16 %v203, %v202
      %vm210 = vcmask 392192
      %v212 = vsel %vm210, %v191, 0
      %214 = vmatprep.subr.bf16.mxu0 0
      %215 = vmatpush1.bf16.msra.mxu0 %v204
      %216 = vmatprep.subr.bf16.mxu0 0
      %217 = vmatpush1.bf16.msra.mxu0 %v205
      %218 = vmatprep.subr.bf16.mxu0 0
      %219 = vmatpush1.bf16.msra.mxu0 %v206
      %220 = vmatprep.subr.bf16.mxu0 0
      %221 = vmatpush1.bf16.msra.mxu0 0
      %222 = vmatprep.subr.bf16.mxu0 0
      %223 = vmatpush1.bf16.msra.mxu0 0
      %224 = vmatprep.subr.bf16.mxu0 0
      %225 = vmatpush1.bf16.msra.mxu0 0
      %226 = vmatprep.subr.bf16.mxu0 0
      %227 = vmatpush1.bf16.msra.mxu0 0
      %228 = vmatprep.subr.bf16.mxu0 0
      %229 = vmatpush1.bf16.msra.mxu0 0
      %230 = vmatprep.subr.bf16.mxu0 0
      %231 = vmatpush1.bf16.msra.mxu0 0
      %232 = vmatprep.subr.bf16.mxu0 0
      %233 = vmatpush1.bf16.msra.mxu0 0
      %234 = vmatprep.subr.bf16.mxu0 0
      %235 = vmatpush1.bf16.msra.mxu0 0
      %236 = vmatprep.subr.bf16.mxu0 0
      %237 = vmatpush1.bf16.msra.mxu0 0
      %238 = vmatprep.subr.bf16.mxu0 0
      %239 = vmatpush1.bf16.msra.mxu0 0
      %240 = vmatprep.subr.bf16.mxu0 0
      %241 = vmatpush1.bf16.msra.mxu0 0
      %242 = vmatprep.subr.bf16.mxu0 0
      %243 = vmatpush1.bf16.msra.mxu0 0
      %244 = vmatprep.subr.bf16.mxu0 0
      %245 = vmatpush1.bf16.msra.mxu0 0
      %246 = vmatprep.mubr.bf16.mxu0 0
      %247 = vmatmul.mubr.bf16.gmra.mrb[0].mxu0 %v212
      %v248 = vpop.f32.mrb[0].mxu0
      %v249 = vadd.f32 %v185, %v248
      %v250 = vpop.f32.mrb[0].mxu0
      %v251 = vpop.f32.mrb[0].mxu0
      %v252 = vadd.f32 %v185, %v251
      %v253 = vpop.f32.mrb[0].mxu0
      %254 = vdwg.mxu0
      %vm255 = vcmask 261120
      %256 = vst.msk [vmem:[%s170] sm:$0xff] %vm255, %v249
      %257 = vst.msk [vmem:[%s170 + $0x8] sm:$0xff] %vm255, %v252
      %p258 = scmp.lt.s32.totalorder %s14, 1
      %s259 = scalar_select %p258, %s14, 1
      %s260 = smul.addr %s259, 2
      %s261 = smul.addr %s260, 8
      %s262 = scalar_lea.vmem %s3, %s261
      // Predicated region
      $region33: #{mlp_mix_forward.2} parent=31 // pred_check
        %p263 = pneg %p100
      $region34: #{mlp_mix_forward.2} parent=31 // pred_check_branch
        %265 = sbr.rel (%p263) target = $region36
      $region35: #{mlp_mix_forward.2} parent=31 // pred_region
        _
      $region36: #{mlp_mix_forward.2} parent=31 // pred_fallthru
        _
    $region32: #{mlp_mix_forward.2} parent=5 // pred_fallthru
      _
    %p266 = scmp.le.s32.totalorder 2, %s9
    // Predicated region
    $region37: #{mlp_mix_forward.2} parent=5 // pred_check
      %p267 = pneg %p266
    $region38: #{mlp_mix_forward.2} parent=5 // pred_check_branch
      %269 = sbr.rel (%p267) target = $region40
    $region39: #{mlp_mix_forward.2} parent=5 // pred_region
      %s270 = ssub.s32 %s9, 2
      // Predicated region
      $region41: #{mlp_mix_forward.2} parent=39 // pred_check
        %p271 = pneg %p106
      $region42: #{mlp_mix_forward.2} parent=39 // pred_check_branch
        %273 = sbr.rel (%p271) target = $region44
      $region43: #{mlp_mix_forward.2} parent=39 // pred_region
        %p274 = scmp.lt.s32.totalorder %s15, 1
        %s275 = scalar_select %p274, %s15, 1
        %s276 = smul.addr %s275, 2
        %s277 = smul.addr %s276, 8
        %s278 = scalar_lea.vmem %s3, %s277
      $region44: #{mlp_mix_forward.2} parent=39 // pred_fallthru
        _
    $region40: #{mlp_mix_forward.2} parent=5 // pred_fallthru
      _
  $region6: #{mlp_mix_forward.2} parent=0 // loop_footer
    %s13 = sadd.s32 1, %s9
  $region7: #{mlp_mix_forward.2} parent=0 // loop_footer_branch
    %8 = sbr.rel target = $region3
  $region8: #{mlp_mix_forward.2} parent=0 // loop_exit
    _

// kernel: mlp_mix_forward.3
$region0: #{mlp_mix_forward.3}
  #allocation0 [shape = 'u32[]', space=smem, size = 0x4, offset = 0x4, fixed_abs, tag = 'smem constant byte address 0x4 - core index']
  #allocation1 [shape = 'u32[144,128]{1,0:T(1,128)}', space=vmem, size = 0x12000, scoped, tag = 'internal scratch']
  #allocation2 [shape = 'bf16[16,32]{1,0:T(16,128)(2,1)}', space=vmem, size = 0x1000, scoped, tag = 'scratch operand']
  %s0 = inlined_call_operand.vmem [shape: f32[2,16,32], index: 0, kind: input, shape index: {}]
  %s1 = inlined_call_operand.vmem [shape: f32[2,1,32], index: 1, kind: input, shape index: {}]
  %s2 = inlined_call_operand.vmem [shape: f32[2,1,32], index: 2, kind: input, shape index: {}]
  %s3 = inlined_call_operand.vmem [shape: bf16[2,32,16], index: 3, kind: input, shape index: {}]
  %s4 = inlined_call_operand.vmem [shape: f32[2,32,1], index: 4, kind: input, shape index: {}]
  %s5 = inlined_call_operand.vmem [shape: bf16[2,16,32], index: 5, kind: input, shape index: {}]
  %s6 = inlined_call_operand.vmem [shape: f32[2,16,1], index: 6, kind: input, shape index: {}]
  %s7 = inlined_call_operand.vmem [shape: bf16[2,32,32], index: 7, kind: input, shape index: {}]
  %s8 = inlined_call_operand.vmem [shape: f32[2,1,32], index: 8, kind: input, shape index: {}]
  %s9 = inlined_call_operand.vmem [shape: bf16[2,32,32], index: 9, kind: input, shape index: {}]
  %s10 = inlined_call_operand.vmem [shape: f32[2,1,32], index: 10, kind: input, shape index: {}]
  %s11 = inlined_call_operand.hbm [shape: f32[2,16,32], index: 11, kind: output, shape index: {}]
  %s12 = sld [smem:[#allocation0]]
  $region81: #{mlp_mix_forward.3} parent=0
    _
  %s14 = ssub.s32 1, %s12
  %s15 = scalar_select 0, %s14, %s12
  $region1: #{mlp_mix_forward.3} parent=0
    #allocation3 [shape = 'u8[16384]{0}', space=vmem, size = 0x4000, scoped, tag = 'output window, operand 0']
    #allocation4 [shape = 's32[2]{0}', space=sflag, size = 0x8, scoped, tag = 'scoped memory for mlp_mix_forward.3']
    %16 = vsyncpa [#allocation4], 0
    %s17 = scalar_lea.sflag [#allocation4], 1
    %18 = vsyncpa %s17, 0
    loop: start=0, step=1, limit=6
    $region2: #{mlp_mix_forward.3} parent=1 // loop_pre_header
      _
    $region3: #{mlp_mix_forward.3} parent=1 // loop_header
      %s20 = sphi 0, %s24
      %p21 = scmp.ge.s32.totalorder %s20, 6
      %s27 = sphi 0, %s39
      %s28 = sphi 0, %s35
      %s29 = sphi 0, %s27
      %s30 = sphi 0, %s28
      %s31 = sphi 0, %s29
      %s32 = sphi 0, %s30
      %s42 = sphi 0, %s44
      %s45 = sphi 0, %s42
      %s46 = sphi 0, %s45
      %s62 = sphi 0, %s46
      %s68 = sphi 0, %s70
      %s71 = sphi 0, %s68
      %s72 = sphi 0, %s71
      %s88 = sphi 0, %s72
      %s94 = sphi 0, %s96
      %s97 = sphi 0, %s94
      %s98 = sphi 0, %s97
      %s114 = sphi 0, %s98
      %s120 = sphi 0, %s122
      %s123 = sphi 0, %s120
      %s124 = sphi 0, %s123
      %s140 = sphi 0, %s124
      %s146 = sphi 0, %s148
      %s149 = sphi 0, %s146
      %s150 = sphi 0, %s149
      %s166 = sphi 0, %s150
      %s172 = sphi 0, %s174
      %s175 = sphi 0, %s172
      %s176 = sphi 0, %s175
      %s192 = sphi 0, %s176
      %s198 = sphi 0, %s200
      %s201 = sphi 0, %s198
      %s202 = sphi 0, %s201
      %s218 = sphi 0, %s202
      %s224 = sphi 0, %s226
      %s227 = sphi 0, %s224
      %s228 = sphi 0, %s227
      %s244 = sphi 0, %s228
      %s250 = sphi 0, %s252
      %s253 = sphi 0, %s250
      %s254 = sphi 0, %s253
      %s270 = sphi 0, %s254
      %s276 = sphi 0, %s278
      %s279 = sphi 0, %s276
      %s280 = sphi 0, %s279
      %s296 = sphi 0, %s280
      %s302 = sphi 0, %s304
      %s305 = sphi 0, %s302
      %s306 = sphi 0, %s305
      %s322 = sphi 0, %s306
      %s328 = sphi 0, %s330
      %s331 = sphi 0, %s328
      %s332 = sphi 0, %s331
      %s348 = sphi 0, %s332
    $region4: #{mlp_mix_forward.3} parent=1 // loop_header_branch
      %23 = sbr.rel (%p21) target = $region8
    $region5: #{mlp_mix_forward.3} parent=1 // loop_body
      %s25 = ssub.s32 %s20, 1
      %s26 = ssub.s32 %s20, 2
      %s33 = sadd.s32 1, %s28
      %p34 = scmp.ge.s32.totalorder %s33, 2
      %s35 = scalar_select %p34, 0, %s33
      %s36 = sadd.s32 1, %s27
      %s37 = scalar_select %p34, %s36, %s27
      %p38 = scmp.ge.s32.totalorder %s37, 2
      %s39 = scalar_select %p38, 0, %s37
      %s40 = ssub.s32 %s27, %s39
      %p41 = scmp.eq.s32.totalorder %s40, 0
      %s43 = sadd.s32 %s42, 1
      %s44 = scalar_select %p41, %s42, %s43
      %p47 = pneg %p41
      %p48 = scmp.eq.s32.totalorder %s20, 3
      %p49 = por %p47, %p48
      %p50 = scmp.ne.s32.totalorder %s42, %s45
      %p51 = scmp.eq.s32.totalorder %s20, 0
      %p52 = por %p50, %p51
      %p53 = scmp.ne.s32.totalorder %s42, %s45
      %p54 = scmp.eq.s32.totalorder %s25, 3
      %p55 = por %p53, %p54
      %p56 = scmp.ne.s32.totalorder %s45, %s46
      %p57 = scmp.eq.s32.totalorder %s25, 0
      %p58 = por %p56, %p57
      %p59 = scmp.ne.s32.totalorder %s45, %s46
      %p60 = scmp.eq.s32.totalorder %s26, 3
      %p61 = por %p59, %p60
      %p63 = scmp.ne.s32.totalorder %s46, %s62
      %p64 = scmp.eq.s32.totalorder %s26, 0
      %p65 = por %p63, %p64
      %s66 = ssub.s32 %s28, %s35
      %p67 = scmp.eq.s32.totalorder %s66, 0
      %s69 = sadd.s32 %s68, 1
      %s70 = scalar_select %p67, %s68, %s69
      %p73 = pneg %p67
      %p74 = scmp.eq.s32.totalorder %s20, 3
      %p75 = por %p73, %p74
      %p76 = scmp.ne.s32.totalorder %s68, %s71
      %p77 = scmp.eq.s32.totalorder %s20, 0
      %p78 = por %p76, %p77
      %p79 = scmp.ne.s32.totalorder %s68, %s71
      %p80 = scmp.eq.s32.totalorder %s25, 3
      %p81 = por %p79, %p80
      %p82 = scmp.ne.s32.totalorder %s71, %s72
      %p83 = scmp.eq.s32.totalorder %s25, 0
      %p84 = por %p82, %p83
      %p85 = scmp.ne.s32.totalorder %s71, %s72
      %p86 = scmp.eq.s32.totalorder %s26, 3
      %p87 = por %p85, %p86
      %p89 = scmp.ne.s32.totalorder %s72, %s88
      %p90 = scmp.eq.s32.totalorder %s26, 0
      %p91 = por %p89, %p90
      %s92 = ssub.s32 %s28, %s35
      %p93 = scmp.eq.s32.totalorder %s92, 0
      %s95 = sadd.s32 %s94, 1
      %s96 = scalar_select %p93, %s94, %s95
      %p99 = pneg %p93
      %p100 = scmp.eq.s32.totalorder %s20, 3
      %p101 = por %p99, %p100
      %p102 = scmp.ne.s32.totalorder %s94, %s97
      %p103 = scmp.eq.s32.totalorder %s20, 0
      %p104 = por %p102, %p103
      %p105 = scmp.ne.s32.totalorder %s94, %s97
      %p106 = scmp.eq.s32.totalorder %s25, 3
      %p107 = por %p105, %p106
      %p108 = scmp.ne.s32.totalorder %s97, %s98
      %p109 = scmp.eq.s32.totalorder %s25, 0
      %p110 = por %p108, %p109
      %p111 = scmp.ne.s32.totalorder %s97, %s98
      %p112 = scmp.eq.s32.totalorder %s26, 3
      %p113 = por %p111, %p112
      %p115 = scmp.ne.s32.totalorder %s98, %s114
      %p116 = scmp.eq.s32.totalorder %s26, 0
      %p117 = por %p115, %p116
      %s118 = ssub.s32 %s28, %s35
      %p119 = scmp.eq.s32.totalorder %s118, 0
      %s121 = sadd.s32 %s120, 1
      %s122 = scalar_select %p119, %s120, %s121
      %p125 = pneg %p119
      %p126 = scmp.eq.s32.totalorder %s20, 3
      %p127 = por %p125, %p126
      %p128 = scmp.ne.s32.totalorder %s120, %s123
      %p129 = scmp.eq.s32.totalorder %s20, 0
      %p130 = por %p128, %p129
      %p131 = scmp.ne.s32.totalorder %s120, %s123
      %p132 = scmp.eq.s32.totalorder %s25, 3
      %p133 = por %p131, %p132
      %p134 = scmp.ne.s32.totalorder %s123, %s124
      %p135 = scmp.eq.s32.totalorder %s25, 0
      %p136 = por %p134, %p135
      %p137 = scmp.ne.s32.totalorder %s123, %s124
      %p138 = scmp.eq.s32.totalorder %s26, 3
      %p139 = por %p137, %p138
      %p141 = scmp.ne.s32.totalorder %s124, %s140
      %p142 = scmp.eq.s32.totalorder %s26, 0
      %p143 = por %p141, %p142
      %s144 = ssub.s32 %s28, %s35
      %p145 = scmp.eq.s32.totalorder %s144, 0
      %s147 = sadd.s32 %s146, 1
      %s148 = scalar_select %p145, %s146, %s147
      %p151 = pneg %p145
      %p152 = scmp.eq.s32.totalorder %s20, 3
      %p153 = por %p151, %p152
      %p154 = scmp.ne.s32.totalorder %s146, %s149
      %p155 = scmp.eq.s32.totalorder %s20, 0
      %p156 = por %p154, %p155
      %p157 = scmp.ne.s32.totalorder %s146, %s149
      %p158 = scmp.eq.s32.totalorder %s25, 3
      %p159 = por %p157, %p158
      %p160 = scmp.ne.s32.totalorder %s149, %s150
      %p161 = scmp.eq.s32.totalorder %s25, 0
      %p162 = por %p160, %p161
      %p163 = scmp.ne.s32.totalorder %s149, %s150
      %p164 = scmp.eq.s32.totalorder %s26, 3
      %p165 = por %p163, %p164
      %p167 = scmp.ne.s32.totalorder %s150, %s166
      %p168 = scmp.eq.s32.totalorder %s26, 0
      %p169 = por %p167, %p168
      %s170 = ssub.s32 %s28, %s35
      %p171 = scmp.eq.s32.totalorder %s170, 0
      %s173 = sadd.s32 %s172, 1
      %s174 = scalar_select %p171, %s172, %s173
      %p177 = pneg %p171
      %p178 = scmp.eq.s32.totalorder %s20, 3
      %p179 = por %p177, %p178
      %p180 = scmp.ne.s32.totalorder %s172, %s175
      %p181 = scmp.eq.s32.totalorder %s20, 0
      %p182 = por %p180, %p181
      %p183 = scmp.ne.s32.totalorder %s172, %s175
      %p184 = scmp.eq.s32.totalorder %s25, 3
      %p185 = por %p183, %p184
      %p186 = scmp.ne.s32.totalorder %s175, %s176
      %p187 = scmp.eq.s32.totalorder %s25, 0
      %p188 = por %p186, %p187
      %p189 = scmp.ne.s32.totalorder %s175, %s176
      %p190 = scmp.eq.s32.totalorder %s26, 3
      %p191 = por %p189, %p190
      %p193 = scmp.ne.s32.totalorder %s176, %s192
      %p194 = scmp.eq.s32.totalorder %s26, 0
      %p195 = por %p193, %p194
      %s196 = ssub.s32 %s28, %s35
      %p197 = scmp.eq.s32.totalorder %s196, 0
      %s199 = sadd.s32 %s198, 1
      %s200 = scalar_select %p197, %s198, %s199
      %p203 = pneg %p197
      %p204 = scmp.eq.s32.totalorder %s20, 3
      %p205 = por %p203, %p204
      %p206 = scmp.ne.s32.totalorder %s198, %s201
      %p207 = scmp.eq.s32.totalorder %s20, 0
      %p208 = por %p206, %p207
      %p209 = scmp.ne.s32.totalorder %s198, %s201
      %p210 = scmp.eq.s32.totalorder %s25, 3
      %p211 = por %p209, %p210
      %p212 = scmp.ne.s32.totalorder %s201, %s202
      %p213 = scmp.eq.s32.totalorder %s25, 0
      %p214 = por %p212, %p213
      %p215 = scmp.ne.s32.totalorder %s201, %s202
      %p216 = scmp.eq.s32.totalorder %s26, 3
      %p217 = por %p215, %p216
      %p219 = scmp.ne.s32.totalorder %s202, %s218
      %p220 = scmp.eq.s32.totalorder %s26, 0
      %p221 = por %p219, %p220
      %s222 = ssub.s32 %s28, %s35
      %p223 = scmp.eq.s32.totalorder %s222, 0
      %s225 = sadd.s32 %s224, 1
      %s226 = scalar_select %p223, %s224, %s225
      %p229 = pneg %p223
      %p230 = scmp.eq.s32.totalorder %s20, 3
      %p231 = por %p229, %p230
      %p232 = scmp.ne.s32.totalorder %s224, %s227
      %p233 = scmp.eq.s32.totalorder %s20, 0
      %p234 = por %p232, %p233
      %p235 = scmp.ne.s32.totalorder %s224, %s227
      %p236 = scmp.eq.s32.totalorder %s25, 3
      %p237 = por %p235, %p236
      %p238 = scmp.ne.s32.totalorder %s227, %s228
      %p239 = scmp.eq.s32.totalorder %s25, 0
      %p240 = por %p238, %p239
      %p241 = scmp.ne.s32.totalorder %s227, %s228
      %p242 = scmp.eq.s32.totalorder %s26, 3
      %p243 = por %p241, %p242
      %p245 = scmp.ne.s32.totalorder %s228, %s244
      %p246 = scmp.eq.s32.totalorder %s26, 0
      %p247 = por %p245, %p246
      %s248 = ssub.s32 %s28, %s35
      %p249 = scmp.eq.s32.totalorder %s248, 0
      %s251 = sadd.s32 %s250, 1
      %s252 = scalar_select %p249, %s250, %s251
      %p255 = pneg %p249
      %p256 = scmp.eq.s32.totalorder %s20, 3
      %p257 = por %p255, %p256
      %p258 = scmp.ne.s32.totalorder %s250, %s253
      %p259 = scmp.eq.s32.totalorder %s20, 0
      %p260 = por %p258, %p259
      %p261 = scmp.ne.s32.totalorder %s250, %s253
      %p262 = scmp.eq.s32.totalorder %s25, 3
      %p263 = por %p261, %p262
      %p264 = scmp.ne.s32.totalorder %s253, %s254
      %p265 = scmp.eq.s32.totalorder %s25, 0
      %p266 = por %p264, %p265
      %p267 = scmp.ne.s32.totalorder %s253, %s254
      %p268 = scmp.eq.s32.totalorder %s26, 3
      %p269 = por %p267, %p268
      %p271 = scmp.ne.s32.totalorder %s254, %s270
      %p272 = scmp.eq.s32.totalorder %s26, 0
      %p273 = por %p271, %p272
      %s274 = ssub.s32 %s28, %s35
      %p275 = scmp.eq.s32.totalorder %s274, 0
      %s277 = sadd.s32 %s276, 1
      %s278 = scalar_select %p275, %s276, %s277
      %p281 = pneg %p275
      %p282 = scmp.eq.s32.totalorder %s20, 3
      %p283 = por %p281, %p282
      %p284 = scmp.ne.s32.totalorder %s276, %s279
      %p285 = scmp.eq.s32.totalorder %s20, 0
      %p286 = por %p284, %p285
      %p287 = scmp.ne.s32.totalorder %s276, %s279
      %p288 = scmp.eq.s32.totalorder %s25, 3
      %p289 = por %p287, %p288
      %p290 = scmp.ne.s32.totalorder %s279, %s280
      %p291 = scmp.eq.s32.totalorder %s25, 0
      %p292 = por %p290, %p291
      %p293 = scmp.ne.s32.totalorder %s279, %s280
      %p294 = scmp.eq.s32.totalorder %s26, 3
      %p295 = por %p293, %p294
      %p297 = scmp.ne.s32.totalorder %s280, %s296
      %p298 = scmp.eq.s32.totalorder %s26, 0
      %p299 = por %p297, %p298
      %s300 = ssub.s32 %s28, %s35
      %p301 = scmp.eq.s32.totalorder %s300, 0
      %s303 = sadd.s32 %s302, 1
      %s304 = scalar_select %p301, %s302, %s303
      %p307 = pneg %p301
      %p308 = scmp.eq.s32.totalorder %s20, 3
      %p309 = por %p307, %p308
      %p310 = scmp.ne.s32.totalorder %s302, %s305
      %p311 = scmp.eq.s32.totalorder %s20, 0
      %p312 = por %p310, %p311
      %p313 = scmp.ne.s32.totalorder %s302, %s305
      %p314 = scmp.eq.s32.totalorder %s25, 3
      %p315 = por %p313, %p314
      %p316 = scmp.ne.s32.totalorder %s305, %s306
      %p317 = scmp.eq.s32.totalorder %s25, 0
      %p318 = por %p316, %p317
      %p319 = scmp.ne.s32.totalorder %s305, %s306
      %p320 = scmp.eq.s32.totalorder %s26, 3
      %p321 = por %p319, %p320
      %p323 = scmp.ne.s32.totalorder %s306, %s322
      %p324 = scmp.eq.s32.totalorder %s26, 0
      %p325 = por %p323, %p324
      %s326 = ssub.s32 %s27, %s39
      %p327 = scmp.eq.s32.totalorder %s326, 0
      %s329 = sadd.s32 %s328, 1
      %s330 = scalar_select %p327, %s328, %s329
      %p333 = pneg %p327
      %p334 = scmp.eq.s32.totalorder %s20, 3
      %p335 = por %p333, %p334
      %p336 = scmp.ne.s32.totalorder %s328, %s331
      %p337 = scmp.eq.s32.totalorder %s20, 0
      %p338 = por %p336, %p337
      %p339 = scmp.ne.s32.totalorder %s328, %s331
      %p340 = scmp.eq.s32.totalorder %s25, 3
      %p341 = por %p339, %p340
      %p342 = scmp.ne.s32.totalorder %s331, %s332
      %p343 = scmp.eq.s32.totalorder %s25, 0
      %p344 = por %p342, %p343
      %p345 = scmp.ne.s32.totalorder %s331, %s332
      %p346 = scmp.eq.s32.totalorder %s26, 3
      %p347 = por %p345, %p346
      %p349 = scmp.ne.s32.totalorder %s332, %s348
      %p350 = scmp.eq.s32.totalorder %s26, 0
      %p351 = por %p349, %p350
      %p352 = scmp.le.s32.totalorder 1, %s20
      %p353 = scmp.lt.s32.totalorder %s20, 5
      %p354 = pnand %p352, %p353
      %p355 = pneg %p354
      // Predicated region
      $region9: #{mlp_mix_forward.3} parent=5 // pred_check
        _
      $region10: #{mlp_mix_forward.3} parent=5 // pred_check_branch
        %357 = sbr.rel (%p354) target = $region12
      $region11: #{mlp_mix_forward.3} parent=5 // pred_region
        %s358 = ssub.s32 %s20, 1
      $region12: #{mlp_mix_forward.3} parent=5 // pred_fallthru
        _
      %p359 = scmp.lt.s32.totalorder %s20, 4
      // Predicated region
      $region13: #{mlp_mix_forward.3} parent=5 // pred_check
        %p360 = pneg %p359
      $region14: #{mlp_mix_forward.3} parent=5 // pred_check_branch
        %362 = sbr.rel (%p360) target = $region16
      $region15: #{mlp_mix_forward.3} parent=5 // pred_region
        // Predicated region
        $region17: #{mlp_mix_forward.3} parent=15 // pred_check
          %p363 = pneg %p52
        $region18: #{mlp_mix_forward.3} parent=15 // pred_check_branch
          %365 = sbr.rel (%p363) target = $region20
        $region19: #{mlp_mix_forward.3} parent=15 // pred_region
          %p366 = scmp.lt.s32.totalorder %s27, 1
          %s367 = scalar_select %p366, %s27, 1
          %s368 = smul.addr %s367, 2
          %s369 = smul.addr %s368, 8
          %s370 = scalar_lea.vmem %s0, %s369
        $region20: #{mlp_mix_forward.3} parent=15 // pred_fallthru
          _
        // Predicated region
        $region21: #{mlp_mix_forward.3} parent=15 // pred_check
          %p371 = pneg %p78
        $region22: #{mlp_mix_forward.3} parent=15 // pred_check_branch
          %373 = sbr.rel (%p371) target = $region24
        $region23: #{mlp_mix_forward.3} parent=15 // pred_region
          %p374 = scmp.lt.s32.totalorder %s28, 1
          %s375 = scalar_select %p374, %s28, 1
          %s376 = scalar_lea.vmem %s1, %s375
        $region24: #{mlp_mix_forward.3} parent=15 // pred_fallthru
          _
        // Predicated region
        $region25: #{mlp_mix_forward.3} parent=15 // pred_check
          %p377 = pneg %p104
        $region26: #{mlp_mix_forward.3} parent=15 // pred_check_branch
          %379 = sbr.rel (%p377) target = $region28
        $region27: #{mlp_mix_forward.3} parent=15 // pred_region
          %p380 = scmp.lt.s32.totalorder %s28, 1
          %s381 = scalar_select %p380, %s28, 1
          %s382 = scalar_lea.vmem %s2, %s381
        $region28: #{mlp_mix_forward.3} parent=15 // pred_fallthru
          _
        // Predicated region
        $region29: #{mlp_mix_forward.3} parent=15 // pred_check
          %p383 = pneg %p130
        $region30: #{mlp_mix_forward.3} parent=15 // pred_check_branch
          %385 = sbr.rel (%p383) target = $region32
        $region31: #{mlp_mix_forward.3} parent=15 // pred_region
          %p386 = scmp.lt.s32.totalorder %s28, 1
          %s387 = scalar_select %p386, %s28, 1
          %s388 = smul.addr %s387, 4
          %s389 = smul.addr %s388, 4
          %s390 = scalar_lea.vmem %s3, %s389
        $region32: #{mlp_mix_forward.3} parent=15 // pred_fallthru
          _
        // Predicated region
        $region33: #{mlp_mix_forward.3} parent=15 // pred_check
          %p391 = pneg %p156
        $region34: #{mlp_mix_forward.3} parent=15 // pred_check_branch
          %393 = sbr.rel (%p391) target = $region36
        $region35: #{mlp_mix_forward.3} parent=15 // pred_region
          %p394 = scmp.lt.s32.totalorder %s28, 1
          %s395 = scalar_select %p394, %s28, 1
          %s396 = smul.addr %s395, 4
          %s397 = smul.addr %s396, 8
          %s398 = scalar_lea.vmem %s4, %s397
        $region36: #{mlp_mix_forward.3} parent=15 // pred_fallthru
          _
        // Predicated region
        $region37: #{mlp_mix_forward.3} parent=15 // pred_check
          %p399 = pneg %p182
        $region38: #{mlp_mix_forward.3} parent=15 // pred_check_branch
          %401 = sbr.rel (%p399) target = $region40
        $region39: #{mlp_mix_forward.3} parent=15 // pred_region
          %p402 = scmp.lt.s32.totalorder %s28, 1
          %s403 = scalar_select %p402, %s28, 1
          %s404 = smul.addr %s403, 2
          %s405 = smul.addr %s404, 4
          %s406 = scalar_lea.vmem %s5, %s405
        $region40: #{mlp_mix_forward.3} parent=15 // pred_fallthru
          _
        // Predicated region
        $region41: #{mlp_mix_forward.3} parent=15 // pred_check
          %p407 = pneg %p208
        $region42: #{mlp_mix_forward.3} parent=15 // pred_check_branch
          %409 = sbr.rel (%p407) target = $region44
        $region43: #{mlp_mix_forward.3} parent=15 // pred_region
          %p410 = scmp.lt.s32.totalorder %s28, 1
          %s411 = scalar_select %p410, %s28, 1
          %s412 = smul.addr %s411, 2
          %s413 = smul.addr %s412, 8
          %s414 = scalar_lea.vmem %s6, %s413
        $region44: #{mlp_mix_forward.3} parent=15 // pred_fallthru
          _
        // Predicated region
        $region45: #{mlp_mix_forward.3} parent=15 // pred_check
          %p415 = pneg %p234
        $region46: #{mlp_mix_forward.3} parent=15 // pred_check_branch
          %417 = sbr.rel (%p415) target = $region48
        $region47: #{mlp_mix_forward.3} parent=15 // pred_region
          %p418 = scmp.lt.s32.totalorder %s28, 1
          %s419 = scalar_select %p418, %s28, 1
          %s420 = smul.addr %s419, 4
          %s421 = smul.addr %s420, 4
          %s422 = scalar_lea.vmem %s7, %s421
        $region48: #{mlp_mix_forward.3} parent=15 // pred_fallthru
          _
        // Predicated region
        $region49: #{mlp_mix_forward.3} parent=15 // pred_check
          %p423 = pneg %p260
        $region50: #{mlp_mix_forward.3} parent=15 // pred_check_branch
          %425 = sbr.rel (%p423) target = $region52
        $region51: #{mlp_mix_forward.3} parent=15 // pred_region
          %p426 = scmp.lt.s32.totalorder %s28, 1
          %s427 = scalar_select %p426, %s28, 1
          %s428 = scalar_lea.vmem %s8, %s427
        $region52: #{mlp_mix_forward.3} parent=15 // pred_fallthru
          _
        // Predicated region
        $region53: #{mlp_mix_forward.3} parent=15 // pred_check
          %p429 = pneg %p286
        $region54: #{mlp_mix_forward.3} parent=15 // pred_check_branch
          %431 = sbr.rel (%p429) target = $region56
        $region55: #{mlp_mix_forward.3} parent=15 // pred_region
          %p432 = scmp.lt.s32.totalorder %s28, 1
          %s433 = scalar_select %p432, %s28, 1
          %s434 = smul.addr %s433, 4
          %s435 = smul.addr %s434, 4
          %s436 = scalar_lea.vmem %s9, %s435
        $region56: #{mlp_mix_forward.3} parent=15 // pred_fallthru
          _
        // Predicated region
        $region57: #{mlp_mix_forward.3} parent=15 // pred_check
          %p437 = pneg %p312
        $region58: #{mlp_mix_forward.3} parent=15 // pred_check_branch
          %439 = sbr.rel (%p437) target = $region60
        $region59: #{mlp_mix_forward.3} parent=15 // pred_region
          %p440 = scmp.lt.s32.totalorder %s28, 1
          %s441 = scalar_select %p440, %s28, 1
          %s442 = scalar_lea.vmem %s10, %s441
        $region60: #{mlp_mix_forward.3} parent=15 // pred_fallthru
          _
      $region16: #{mlp_mix_forward.3} parent=5 // pred_fallthru
        _
      %p443 = scmp.le.s32.totalorder 1, %s20
      %p444 = scmp.lt.s32.totalorder %s20, 5
      %p445 = pnand %p443, %p444
      %p446 = pneg %p445
      // Predicated region
      $region61: #{mlp_mix_forward.3} parent=5 // pred_check
        _
      $region62: #{mlp_mix_forward.3} parent=5 // pred_check_branch
        %448 = sbr.rel (%p445) target = $region64
      $region63: #{mlp_mix_forward.3} parent=5 // pred_region
        %s449 = ssub.s32 %s20, 1
        %p450 = scmp.lt.s32.totalorder %s29, 1
        %s451 = scalar_select %p450, %s29, 1
        %s452 = smul.addr %s451, 2
        %s453 = smul.addr %s452, 8
        %s454 = scalar_lea.vmem %s0, %s453
        %p455 = pneg %p58
        %p456 = pneg %p55
        %p457 = scmp.lt.s32.totalorder %s30, 1
        %s458 = scalar_select %p457, %s30, 1
        %s459 = scalar_lea.vmem %s1, %s458
        %p460 = pneg %p84
        %p461 = pneg %p81
        %p462 = scmp.lt.s32.totalorder %s30, 1
        %s463 = scalar_select %p462, %s30, 1
        %s464 = scalar_lea.vmem %s2, %s463
        %p465 = pneg %p110
        %p466 = pneg %p107
        %p467 = scmp.lt.s32.totalorder %s30, 1
        %s468 = scalar_select %p467, %s30, 1
        %s469 = smul.addr %s468, 4
        %s470 = smul.addr %s469, 4
        %s471 = scalar_lea.vmem %s3, %s470
        %p472 = pneg %p136
        %p473 = pneg %p133
        %p474 = scmp.lt.s32.totalorder %s30, 1
        %s475 = scalar_select %p474, %s30, 1
        %s476 = smul.addr %s475, 4
        %s477 = smul.addr %s476, 8
        %s478 = scalar_lea.vmem %s4, %s477
        %p479 = pneg %p162
        %p480 = pneg %p159
        %p481 = scmp.lt.s32.totalorder %s30, 1
        %s482 = scalar_select %p481, %s30, 1
        %s483 = smul.addr %s482, 2
        %s484 = smul.addr %s483, 4
        %s485 = scalar_lea.vmem %s5, %s484
        %p486 = pneg %p188
        %p487 = pneg %p185
        %p488 = scmp.lt.s32.totalorder %s30, 1
        %s489 = scalar_select %p488, %s30, 1
        %s490 = smul.addr %s489, 2
        %s491 = smul.addr %s490, 8
        %s492 = scalar_lea.vmem %s6, %s491
        %p493 = pneg %p214
        %p494 = pneg %p211
        %p495 = scmp.lt.s32.totalorder %s30, 1
        %s496 = scalar_select %p495, %s30, 1
        %s497 = smul.addr %s496, 4
        %s498 = smul.addr %s497, 4
        %s499 = scalar_lea.vmem %s7, %s498
        %p500 = pneg %p240
        %p501 = pneg %p237
        %p502 = scmp.lt.s32.totalorder %s30, 1
        %s503 = scalar_select %p502, %s30, 1
        %s504 = scalar_lea.vmem %s8, %s503
        %p505 = pneg %p266
        %p506 = pneg %p263
        %p507 = scmp.lt.s32.totalorder %s30, 1
        %s508 = scalar_select %p507, %s30, 1
        %s509 = smul.addr %s508, 4
        %s510 = smul.addr %s509, 4
        %s511 = scalar_lea.vmem %s9, %s510
        %p512 = pneg %p292
        %p513 = pneg %p289
        %p514 = scmp.lt.s32.totalorder %s30, 1
        %s515 = scalar_select %p514, %s30, 1
        %s516 = scalar_lea.vmem %s10, %s515
        %p517 = pneg %p318
        %p518 = pneg %p315
        %p519 = pneg %p344
        %p520 = pneg %p341
        %s521 = sand.u32 %s331, 1
        %s522 = scalar_lea.sflag [#allocation4], %s521
        %s523 = sand.u32 %s331, 1
        %s524 = smul.addr %s523, 16
        %s525 = scalar_lea.vmem [#allocation3], %s524
        %p526 = scmp.lt.s32.totalorder %s29, 1
        %s527 = scalar_select %p526, %s29, 1
        %s528 = smul.addr %s527, 2
        %s529 = smul.addr %s528, 8
        %s530 = scalar_lea.vmem %s0, %s529
        %p531 = scmp.lt.s32.totalorder %s30, 1
        %s532 = scalar_select %p531, %s30, 1
        %s533 = scalar_lea.vmem %s1, %s532
        %p534 = scmp.lt.s32.totalorder %s30, 1
        %s535 = scalar_select %p534, %s30, 1
        %s536 = scalar_lea.vmem %s2, %s535
        %p537 = scmp.lt.s32.totalorder %s30, 1
        %s538 = scalar_select %p537, %s30, 1
        %s539 = smul.addr %s538, 4
        %s540 = smul.addr %s539, 4
        %s541 = scalar_lea.vmem %s3, %s540
        %p542 = scmp.lt.s32.totalorder %s30, 1
        %s543 = scalar_select %p542, %s30, 1
        %s544 = smul.addr %s543, 4
        %s545 = smul.addr %s544, 8
        %s546 = scalar_lea.vmem %s4, %s545
        %p547 = scmp.lt.s32.totalorder %s30, 1
        %s548 = scalar_select %p547, %s30, 1
        %s549 = smul.addr %s548, 2
        %s550 = smul.addr %s549, 4
        %s551 = scalar_lea.vmem %s5, %s550
        %p552 = scmp.lt.s32.totalorder %s30, 1
        %s553 = scalar_select %p552, %s30, 1
        %s554 = smul.addr %s553, 2
        %s555 = smul.addr %s554, 8
        %s556 = scalar_lea.vmem %s6, %s555
        %p557 = scmp.lt.s32.totalorder %s30, 1
        %s558 = scalar_select %p557, %s30, 1
        %s559 = smul.addr %s558, 4
        %s560 = smul.addr %s559, 4
        %s561 = scalar_lea.vmem %s7, %s560
        %p562 = scmp.lt.s32.totalorder %s30, 1
        %s563 = scalar_select %p562, %s30, 1
        %s564 = scalar_lea.vmem %s8, %s563
        %p565 = scmp.lt.s32.totalorder %s30, 1
        %s566 = scalar_select %p565, %s30, 1
        %s567 = smul.addr %s566, 4
        %s568 = smul.addr %s567, 4
        %s569 = scalar_lea.vmem %s9, %s568
        %p570 = scmp.lt.s32.totalorder %s30, 1
        %s571 = scalar_select %p570, %s30, 1
        %s572 = scalar_lea.vmem %s10, %s571
        %p574 = scmp.eq.s32.totalorder %s30, 0
        // Predicated region
        $region65: #{mlp_mix_forward.3} parent=63 // pred_check
          %p575 = pneg %p574
        $region66: #{mlp_mix_forward.3} parent=63 // pred_check_branch
          %577 = sbr.rel (%p575) target = $region68
        $region67: #{mlp_mix_forward.3} parent=63 // pred_region
          %v578 = vld [vmem:[%s530] sm:$0xff]
          %v579 = vld [vmem:[%s530 + $0x8] sm:$0xff]
          %vm580 = vcmask 261120
          %581 = vst.msk [vmem:[%s525] sm:$0xff] %vm580, %v578
          %582 = vst.msk [vmem:[%s525 + $0x8] sm:$0xff] %vm580, %v579
        $region68: #{mlp_mix_forward.3} parent=63 // pred_fallthru
          _
        %v583 = vld [vmem:[%s533] sm:$0x1]
        %v584 = vld [vmem:[%s536] sm:$0x1]
        %v585 = vld [vmem:[%s525] sm:$0xff]
        %v586 = vld [vmem:[%s525 + $0x8] sm:$0xff]
        %vm587 = vcmask 261120
        %v588 = vsel %vm587, %v585, 0.0
        %589 = vadd.xlane.f32.xlu0 %v588
        %v590 = vpop.xlane.xlu0 %589
        %v591 = vsel %vm587, %v586, 0.0
        %592 = vadd.xlane.f32.xlu0 %v591
        %v593 = vpop.xlane.xlu0 %592
        %v594 = vrcp.pop 32.0
        %v595 = vmul.f32 %v590, %v594
        %v596 = vmul.f32 %v593, %v594
        %v597 = vmul.f32 %v585, %v585
        %v598 = vmul.f32 %v586, %v586
        %v599 = vsel %vm587, %v597, 0.0
        %600 = vadd.xlane.f32.xlu0 %v599
        %v601 = vpop.xlane.xlu0 %600
        %v602 = vsel %vm587, %v598, 0.0
        %603 = vadd.xlane.f32.xlu0 %v602
        %v604 = vpop.xlane.xlu0 %603
        %v605 = vmul.f32 %v601, %v594
        %v606 = vmul.f32 %v604, %v594
        %v607 = vmul.f32 %v595, %v595
        %v608 = vmul.f32 %v596, %v596
        %v609 = vsub.f32 %v605, %v607
        %v610 = vsub.f32 %v606, %v608
        %v611 = vmax.f32 %v609, 0.0
        %v612 = vmax.f32 %v610, 0.0
        %v613 = vsub.f32 %v585, %v595
        %v614 = vsub.f32 %v586, %v596
        %v615 = vadd.f32 %v611, 1e-05
        %v616 = vadd.f32 %v612, 1e-05
        %v617 = vrsqrt.pop %v615
        %v618 = vrsqrt.pop %v616
        %v619 = vmul.f32 %v613, %v617
        %v620 = vmul.f32 %v614, %v618
        %v622 = vlaneseq
        %v623 = vshrl.u32 %v622, 7
        %v624 = vsub.s32 0, %v623
        %v625 = vrot.slane %v583, %v624
        %v627 = vmul.f32 %v619, %v625
        %v628 = vmul.f32 %v620, %v625
        %v630 = vlaneseq
        %v631 = vshrl.u32 %v630, 7
        %v632 = vsub.s32 0, %v631
        %v633 = vrot.slane %v584, %v632
        %v635 = vadd.f32 %v627, %v633
        %v636 = vadd.f32 %v628, %v633
        %v637 = vpack.c.bf16 %v636, %v635
        %638 = vst.msk [vmem:[#allocation2] sm:$0xff] %vm587, %v637
        %v639 = vld [vmem:[#allocation2] sm:$0xff]
        %v640 = vld [vmem:[%s541] sm:$0xf]
        %v641 = vld [vmem:[%s541 + $0x4] sm:$0xf]
        %v642 = vld [vmem:[%s541 + $0x8] sm:$0xf]
        %v643 = vld [vmem:[%s541 + $0xc] sm:$0xf]
        %v644 = vld [vmem:[%s546] sm:$0xff]
        %v645 = vld [vmem:[%s546 + $0x8] sm:$0xff]
        %v646 = vld [vmem:[%s546 + $0x10] sm:$0xff]
        %v647 = vld [vmem:[%s546 + $0x18] sm:$0xff]
        %649 = vset.pattern.permute.xlu0 0
        %650 = vperm.xlu0 %649, %v644
        %v651 = vpop.permute.xlu0 %650
        %654 = vset.pattern.permute.xlu0 0
        %655 = vperm.xlu0 %654, %v645
        %v656 = vpop.permute.xlu0 %655
        %659 = vset.pattern.permute.xlu0 0
        %660 = vperm.xlu0 %659, %v646
        %v661 = vpop.permute.xlu0 %660
        %664 = vset.pattern.permute.xlu0 0
        %665 = vperm.xlu0 %664, %v647
        %v666 = vpop.permute.xlu0 %665
        %v672 = vunpack.c.l.b16 %v640
        %v673 = vunpack.c.l.b16 %v641
        %v674 = vunpack.c.l.b16 %v642
        %v675 = vunpack.c.l.b16 %v643
        %v676 = vpack.c.b16 %v673, %v672
        %v677 = vpack.c.b16 %v675, %v674
        %vm678 = vcmask 130048
        %v680 = vsel %vm678, %v676, 0
        %v683 = vsel %vm678, %v677, 0
        %685 = vmatprep.subr.bf16.mxu0 0
        %686 = vmatpush1.bf16.msra.mxu0 %v639
        %687 = vmatprep.subr.bf16.mxu0 0
        %688 = vmatpush1.bf16.msra.mxu0 0
        %689 = vmatprep.subr.bf16.mxu0 0
        %690 = vmatpush1.bf16.msra.mxu0 0
        %691 = vmatprep.subr.bf16.mxu0 0
        %692 = vmatpush1.bf16.msra.mxu0 0
        %693 = vmatprep.subr.bf16.mxu0 0
        %694 = vmatpush1.bf16.msra.mxu0 0
        %695 = vmatprep.subr.bf16.mxu0 0
        %696 = vmatpush1.bf16.msra.mxu0 0
        %697 = vmatprep.subr.bf16.mxu0 0
        %698 = vmatpush1.bf16.msra.mxu0 0
        %699 = vmatprep.subr.bf16.mxu0 0
        %700 = vmatpush1.bf16.msra.mxu0 0
        %701 = vmatprep.subr.bf16.mxu0 0
        %702 = vmatpush1.bf16.msra.mxu0 0
        %703 = vmatprep.subr.bf16.mxu0 0
        %704 = vmatpush1.bf16.msra.mxu0 0
        %705 = vmatprep.subr.bf16.mxu0 0
        %706 = vmatpush1.bf16.msra.mxu0 0
        %707 = vmatprep.subr.bf16.mxu0 0
        %708 = vmatpush1.bf16.msra.mxu0 0
        %709 = vmatprep.subr.bf16.mxu0 0
        %710 = vmatpush1.bf16.msra.mxu0 0
        %711 = vmatprep.subr.bf16.mxu0 0
        %712 = vmatpush1.bf16.msra.mxu0 0
        %713 = vmatprep.subr.bf16.mxu0 0
        %714 = vmatpush1.bf16.msra.mxu0 0
        %715 = vmatprep.subr.bf16.mxu0 0
        %716 = vmatpush1.bf16.msra.mxu0 0
        %717 = vmatprep.mubr.bf16.mxu0 0
        %718 = vmatmul.mubr.bf16.gmra.mrb[0].mxu0 %v680
        %v719 = vpop.f32.mrb[0].mxu0
        %v720 = vadd.f32 %v651, %v719
        %v721 = vpop.f32.mrb[0].mxu0
        %v722 = vpop.f32.mrb[0].mxu0
        %v723 = vadd.f32 %v656, %v722
        %v724 = vpop.f32.mrb[0].mxu0
        %725 = vmatprep.mubr.bf16.mxu0 0
        %726 = vmatmul.mubr.bf16.gmra.mrb[0].mxu0 %v683
        %v727 = vpop.f32.mrb[0].mxu0
        %v728 = vadd.f32 %v661, %v727
        %v729 = vpop.f32.mrb[0].mxu0
        %v730 = vpop.f32.mrb[0].mxu0
        %v731 = vadd.f32 %v666, %v730
        %v732 = vpop.f32.mrb[0].mxu0
        %733 = vdwg.mxu0
        %v734 = vmul.f32 %v720, 0.5
        %v735 = vmul.f32 %v723, 0.5
        %v736 = vmul.f32 %v728, 0.5
        %v737 = vmul.f32 %v731, 0.5
        %v738 = vmul.f32 %v720, 0.70710677
        %v739 = vmul.f32 %v723, 0.70710677
        %v740 = vmul.f32 %v728, 0.70710677
        %v741 = vmul.f32 %v731, 0.70710677
        %v742 = verf.f32.pop %v738
        %v743 = verf.f32.pop %v739
        %v744 = verf.f32.pop %v740
        %v745 = verf.f32.pop %v741
        %v746 = vadd.f32 %v742, 1.0
        %v747 = vadd.f32 %v743, 1.0
        %v748 = vadd.f32 %v744, 1.0
        %v749 = vadd.f32 %v745, 1.0
        %v750 = vmul.f32 %v734, %v746
        %v751 = vmul.f32 %v735, %v747
        %v752 = vmul.f32 %v736, %v748
        %v753 = vmul.f32 %v737, %v749
        %v754 = vpack.c.bf16 %v751, %v750
        %v755 = vpack.c.bf16 %v753, %v752
        %v756 = vld [vmem:[%s551] sm:$0xf]
        %v757 = vld [vmem:[%s551 + $0x4] sm:$0xf]
        %v758 = vld [vmem:[%s525] sm:$0xff]
        %v759 = vld [vmem:[%s525 + $0x8] sm:$0xff]
        %v760 = vld [vmem:[%s556] sm:$0xff]
        %v761 = vld [vmem:[%s556 + $0x8] sm:$0xff]
        %763 = vset.pattern.permute.xlu0 0
        %764 = vperm.xlu0 %763, %v760
        %v765 = vpop.permute.xlu0 %764
        %768 = vset.pattern.permute.xlu0 0
        %769 = vperm.xlu0 %768, %v761
        %v770 = vpop.permute.xlu0 %769
        %v774 = vunpack.c.l.b16 %v756
        %v775 = vunpack.c.l.b16 %v757
        %v776 = vpack.c.b16 %v775, %v774
        %v778 = vsel %vm587, %v776, 0
        %780 = vmatprep.subr.bf16.mxu0 0
        %781 = vmatpush1.bf16.msra.mxu0 %v754
        %782 = vmatprep.subr.bf16.mxu0 0
        %783 = vmatpush1.bf16.msra.mxu0 %v755
        %784 = vmatprep.subr.bf16.mxu0 0
        %785 = vmatpush1.bf16.msra.mxu0 0
        %786 = vmatprep.subr.bf16.mxu0 0
        %787 = vmatpush1.bf16.msra.mxu0 0
        %788 = vmatprep.subr.bf16.mxu0 0
        %789 = vmatpush1.bf16.msra.mxu0 0
        %790 = vmatprep.subr.bf16.mxu0 0
        %791 = vmatpush1.bf16.msra.mxu0 0
        %792 = vmatprep.subr.bf16.mxu0 0
        %793 = vmatpush1.bf16.msra.mxu0 0
        %794 = vmatprep.subr.bf16.mxu0 0
        %795 = vmatpush1.bf16.msra.mxu0 0
        %796 = vmatprep.subr.bf16.mxu0 0
        %797 = vmatpush1.bf16.msra.mxu0 0
        %798 = vmatprep.subr.bf16.mxu0 0
        %799 = vmatpush1.bf16.msra.mxu0 0
        %800 = vmatprep.subr.bf16.mxu0 0
        %801 = vmatpush1.bf16.msra.mxu0 0
        %802 = vmatprep.subr.bf16.mxu0 0
        %803 = vmatpush1.bf16.msra.mxu0 0
        %804 = vmatprep.subr.bf16.mxu0 0
        %805 = vmatpush1.bf16.msra.mxu0 0
        %806 = vmatprep.subr.bf16.mxu0 0
        %807 = vmatpush1.bf16.msra.mxu0 0
        %808 = vmatprep.subr.bf16.mxu0 0
        %809 = vmatpush1.bf16.msra.mxu0 0
        %810 = vmatprep.subr.bf16.mxu0 0
        %811 = vmatpush1.bf16.msra.mxu0 0
        %812 = vmatprep.mubr.bf16.mxu0 0
        %813 = vmatmul.mubr.bf16.gmra.mrb[0].mxu0 %v778
        %v814 = vpop.f32.mrb[0].mxu0
        %v815 = vadd.f32 %v765, %v814
        %v816 = vpop.f32.mrb[0].mxu0
        %v817 = vpop.f32.mrb[0].mxu0
        %v818 = vadd.f32 %v770, %v817
        %v819 = vpop.f32.mrb[0].mxu0
        %820 = vdwg.mxu0
        %v821 = vadd.f32 %v758, %v815
        %v822 = vadd.f32 %v759, %v818
        %823 = vst.msk [vmem:[%s525] sm:$0xff] %vm587, %v821
        %824 = vst.msk [vmem:[%s525 + $0x8] sm:$0xff] %vm587, %v822
        %v825 = vld [vmem:[%s525] sm:$0xff]
        %v826 = vld [vmem:[%s525 + $0x8] sm:$0xff]
        %v827 = vsel %vm587, %v825, 0.0
        %828 = vadd.xlane.f32.xlu0 %v827
        %v829 = vpop.xlane.xlu0 %828
        %v830 = vsel %vm587, %v826, 0.0
        %831 = vadd.xlane.f32.xlu0 %v830
        %v832 = vpop.xlane.xlu0 %831
        %v833 = vmul.f32 %v829, %v594
        %v834 = vmul.f32 %v832, %v594
        %v835 = vmul.f32 %v825, %v825
        %v836 = vmul.f32 %v826, %v826
        %v837 = vsel %vm587, %v835, 0.0
        %838 = vadd.xlane.f32.xlu0 %v837
        %v839 = vpop.xlane.xlu0 %838
        %v840 = vsel %vm587, %v836, 0.0
        %841 = vadd.xlane.f32.xlu0 %v840
        %v842 = vpop.xlane.xlu0 %841
        %v843 = vmul.f32 %v839, %v594
        %v844 = vmul.f32 %v842, %v594
        %v845 = vmul.f32 %v833, %v833
        %v846 = vmul.f32 %v834, %v834
        %v847 = vsub.f32 %v843, %v845
        %v848 = vsub.f32 %v844, %v846
        %v849 = vmax.f32 %v847, 0.0
        %v850 = vmax.f32 %v848, 0.0
        %v851 = vsub.f32 %v825, %v833
        %v852 = vsub.f32 %v826, %v834
        %v853 = vadd.f32 %v849, 1e-05
        %v854 = vadd.f32 %v850, 1e-05
        %v855 = vrsqrt.pop %v853
        %v856 = vrsqrt.pop %v854
        %v857 = vmul.f32 %v851, %v855
        %v858 = vmul.f32 %v852, %v856
        %v859 = vmul.f32 %v857, %v625
        %v860 = vmul.f32 %v858, %v625
        %v861 = vadd.f32 %v859, %v633
        %v862 = vadd.f32 %v860, %v633
        %v863 = vpack.c.bf16 %v862, %v861
        %v864 = vld [vmem:[%s561] sm:$0xf]
        %v865 = vld [vmem:[%s561 + $0x4] sm:$0xf]
        %v866 = vld [vmem:[%s561 + $0x8] sm:$0xf]
        %v867 = vld [vmem:[%s561 + $0xc] sm:$0xf]
        %v868 = vld [vmem:[%s564] sm:$0x1]
        %v870 = vlaneseq
        %v871 = vshrl.u32 %v870, 7
        %v872 = vsub.s32 0, %v871
        %v873 = vrot.slane %v868, %v872
        %v879 = vunpack.c.l.b16 %v864
        %v880 = vunpack.c.l.b16 %v865
        %v881 = vunpack.c.l.b16 %v866
        %v882 = vunpack.c.l.b16 %v867
        %v883 = vpack.c.b16 %v880, %v879
        %v884 = vpack.c.b16 %v882, %v881
        %v888 = vsel %vm587, %v863, 0
        %890 = vmatprep.subr.bf16.mxu0 0
        %891 = vmatpush1.bf16.msra.mxu0 %v883
        %892 = vmatprep.subr.bf16.mxu0 0
        %893 = vmatpush1.bf16.msra.mxu0 %v884
        %894 = vmatprep.subr.bf16.mxu0 0
        %895 = vmatpush1.bf16.msra.mxu0 0
        %896 = vmatprep.subr.bf16.mxu0 0
        %897 = vmatpush1.bf16.msra.mxu0 0
        %898 = vmatprep.subr.bf16.mxu0 0
        %899 = vmatpush1.bf16.msra.mxu0 0
        %900 = vmatprep.subr.bf16.mxu0 0
        %901 = vmatpush1.bf16.msra.mxu0 0
        %902 = vmatprep.subr.bf16.mxu0 0
        %903 = vmatpush1.bf16.msra.mxu0 0
        %904 = vmatprep.subr.bf16.mxu0 0
        %905 = vmatpush1.bf16.msra.mxu0 0
        %906 = vmatprep.subr.bf16.mxu0 0
        %907 = vmatpush1.bf16.msra.mxu0 0
        %908 = vmatprep.subr.bf16.mxu0 0
        %909 = vmatpush1.bf16.msra.mxu0 0
        %910 = vmatprep.subr.bf16.mxu0 0
        %911 = vmatpush1.bf16.msra.mxu0 0
        %912 = vmatprep.subr.bf16.mxu0 0
        %913 = vmatpush1.bf16.msra.mxu0 0
        %914 = vmatprep.subr.bf16.mxu0 0
        %915 = vmatpush1.bf16.msra.mxu0 0
        %916 = vmatprep.subr.bf16.mxu0 0
        %917 = vmatpush1.bf16.msra.mxu0 0
        %918 = vmatprep.subr.bf16.mxu0 0
        %919 = vmatpush1.bf16.msra.mxu0 0
        %920 = vmatprep.subr.bf16.mxu0 0
        %921 = vmatpush1.bf16.msra.mxu0 0
        %922 = vmatprep.mubr.bf16.mxu0 0
        %923 = vmatmul.mubr.bf16.gmra.mrb[0].mxu0 %v888
        %v924 = vpop.f32.mrb[0].mxu0
        %v925 = vadd.f32 %v873, %v924
        %v926 = vpop.f32.mrb[0].mxu0
        %v927 = vpop.f32.mrb[0].mxu0
        %v928 = vadd.f32 %v873, %v927
        %v929 = vpop.f32.mrb[0].mxu0
        %930 = vdwg.mxu0
        %v931 = vmul.f32 %v925, 0.5
        %v932 = vmul.f32 %v928, 0.5
        %v933 = vmul.f32 %v925, 0.70710677
        %v934 = vmul.f32 %v928, 0.70710677
        %v935 = verf.f32.pop %v933
        %v936 = verf.f32.pop %v934
        %v937 = vadd.f32 %v935, 1.0
        %v938 = vadd.f32 %v936, 1.0
        %v939 = vmul.f32 %v931, %v937
        %v940 = vmul.f32 %v932, %v938
        %v941 = vpack.c.bf16 %v940, %v939
        %v942 = vld [vmem:[%s569] sm:$0xf]
        %v943 = vld [vmem:[%s569 + $0x4] sm:$0xf]
        %v944 = vld [vmem:[%s569 + $0x8] sm:$0xf]
        %v945 = vld [vmem:[%s569 + $0xc] sm:$0xf]
        %v946 = vld [vmem:[%s572] sm:$0x1]
        %v948 = vlaneseq
        %v949 = vshrl.u32 %v948, 7
        %v950 = vsub.s32 0, %v949
        %v951 = vrot.slane %v946, %v950
        %v957 = vunpack.c.l.b16 %v942
        %v958 = vunpack.c.l.b16 %v943
        %v959 = vunpack.c.l.b16 %v944
        %v960 = vunpack.c.l.b16 %v945
        %v961 = vpack.c.b16 %v958, %v957
        %v962 = vpack.c.b16 %v960, %v959
        %v966 = vsel %vm587, %v941, 0
        %968 = vmatprep.subr.bf16.mxu0 0
        %969 = vmatpush1.bf16.msra.mxu0 %v961
        %970 = vmatprep.subr.bf16.mxu0 0
        %971 = vmatpush1.bf16.msra.mxu0 %v962
        %972 = vmatprep.subr.bf16.mxu0 0
        %973 = vmatpush1.bf16.msra.mxu0 0
        %974 = vmatprep.subr.bf16.mxu0 0
        %975 = vmatpush1.bf16.msra.mxu0 0
        %976 = vmatprep.subr.bf16.mxu0 0
        %977 = vmatpush1.bf16.msra.mxu0 0
        %978 = vmatprep.subr.bf16.mxu0 0
        %979 = vmatpush1.bf16.msra.mxu0 0
        %980 = vmatprep.subr.bf16.mxu0 0
        %981 = vmatpush1.bf16.msra.mxu0 0
        %982 = vmatprep.subr.bf16.mxu0 0
        %983 = vmatpush1.bf16.msra.mxu0 0
        %984 = vmatprep.subr.bf16.mxu0 0
        %985 = vmatpush1.bf16.msra.mxu0 0
        %986 = vmatprep.subr.bf16.mxu0 0
        %987 = vmatpush1.bf16.msra.mxu0 0
        %988 = vmatprep.subr.bf16.mxu0 0
        %989 = vmatpush1.bf16.msra.mxu0 0
        %990 = vmatprep.subr.bf16.mxu0 0
        %991 = vmatpush1.bf16.msra.mxu0 0
        %992 = vmatprep.subr.bf16.mxu0 0
        %993 = vmatpush1.bf16.msra.mxu0 0
        %994 = vmatprep.subr.bf16.mxu0 0
        %995 = vmatpush1.bf16.msra.mxu0 0
        %996 = vmatprep.subr.bf16.mxu0 0
        %997 = vmatpush1.bf16.msra.mxu0 0
        %998 = vmatprep.subr.bf16.mxu0 0
        %999 = vmatpush1.bf16.msra.mxu0 0
        %1000 = vmatprep.mubr.bf16.mxu0 0
        %1001 = vmatmul.mubr.bf16.gmra.mrb[0].mxu0 %v966
        %v1002 = vpop.f32.mrb[0].mxu0
        %v1003 = vadd.f32 %v951, %v1002
        %v1004 = vpop.f32.mrb[0].mxu0
        %v1005 = vpop.f32.mrb[0].mxu0
        %v1006 = vadd.f32 %v951, %v1005
        %v1007 = vpop.f32.mrb[0].mxu0
        %1008 = vdwg.mxu0
        %1009 = vst.msk [vmem:[%s525] sm:$0xff] %vm587, %v1003
        %1010 = vst.msk [vmem:[%s525 + $0x8] sm:$0xff] %vm587, %v1006
        %s1011 = sand.u32 %s331, 1
        %s1012 = scalar_lea.sflag [#allocation4], %s1011
        %s1013 = sand.u32 %s331, 1
        %s1014 = smul.addr %s1013, 16
        %s1015 = scalar_lea.vmem [#allocation3], %s1014
        // Predicated region
        $region69: #{mlp_mix_forward.3} parent=63 // pred_check
          %p1016 = pneg %p341
        $region70: #{mlp_mix_forward.3} parent=63 // pred_check_branch
          %1018 = sbr.rel (%p1016) target = $region72
        $region71: #{mlp_mix_forward.3} parent=63 // pred_region
          %s1020 = ssub.s32 256, 256
          %1021 = vsyncadd %s1012, %s1020
          %s1022 = smul.addr %s29, 2
          %s1023 = smul.addr %s1022, 128
          %s1024 = scalar_lea.hbm %s11, %s1023
          %s1025 = sshll.u32 %s1015, 4
          %s1026 = int_to_ptr.vmem [resolvable:$true] %s1025
          %1031 = dma.vmem_to_hbm [thread:$0]  %s1026, 256, %s1024, %s1012, 128, 128, 8
        $region72: #{mlp_mix_forward.3} parent=63 // pred_fallthru
          _
      $region64: #{mlp_mix_forward.3} parent=5 // pred_fallthru
        _
      %p1032 = scmp.le.s32.totalorder 2, %s20
      // Predicated region
      $region73: #{mlp_mix_forward.3} parent=5 // pred_check
        %p1033 = pneg %p1032
      $region74: #{mlp_mix_forward.3} parent=5 // pred_check_branch
        %1035 = sbr.rel (%p1033) target = $region76
      $region75: #{mlp_mix_forward.3} parent=5 // pred_region
        %s1036 = ssub.s32 %s20, 2
        // Predicated region
        $region77: #{mlp_mix_forward.3} parent=75 // pred_check
          %p1037 = pneg %p347
        $region78: #{mlp_mix_forward.3} parent=75 // pred_check_branch
          %1039 = sbr.rel (%p1037) target = $region80
        $region79: #{mlp_mix_forward.3} parent=75 // pred_region
          %s1040 = sand.u32 %s332, 1
          %s1041 = scalar_lea.sflag [#allocation4], %s1040
          %s1042 = sand.u32 %s332, 1
          %s1043 = smul.addr %s1042, 16
          %s1044 = scalar_lea.vmem [#allocation3], %s1043
          %1045 = dma.done %s1041, 256
        $region80: #{mlp_mix_forward.3} parent=75 // pred_fallthru
          _
      $region76: #{mlp_mix_forward.3} parent=5 // pred_fallthru
        _
    $region6: #{mlp_mix_forward.3} parent=1 // loop_footer
      %s24 = sadd.s32 1, %s20
    $region7: #{mlp_mix_forward.3} parent=1 // loop_footer_branch
      %19 = sbr.rel target = $region3
    $region8: #{mlp_mix_forward.3} parent=1 // loop_exit
      _
    %1046 = vsyncpa [#allocation4], 1
    %s1047 = scalar_lea.sflag [#allocation4], 1
    %1048 = vsyncpa %s1047, 1

</llo_original>
